<compile_context>
chip_gen: v7x
topology: tpu7x:2x2x1
jax: 0.10.0
libtpu: 0.0.40
codegen_flags: <defaults>
</compile_context>

<pallas_src>
import math

import jax
import jax.numpy as jnp
import numpy as np
from jax.experimental import pallas as pl
from jax.experimental.pallas import tpu as pltpu

# ---------------- model config (small, consistent with the module) ----------
B, S, H = 2, 8, 32
NUM_HEADS = 4
HEAD_SIZE = H // NUM_HEADS
BS = B * S
FF = 4 * H
EPS = 1e-5
# Block is exercised with dropout = 0.0, so nn.Dropout is exactly identity.
# TODO(synk): stochastic training-mode dropout (p > 0) not implemented.


def _layer_norm(x, gamma, beta):
    mu = jnp.mean(x, axis=-1, keepdims=True)
    var = jnp.mean((x - mu) ** 2, axis=-1, keepdims=True)
    return (x - mu) * jax.lax.rsqrt(var + EPS) * gamma + beta


# ---------------------------- Pallas kernel ---------------------------------
def gpt2_block_kernel(x_ref, keep_ref, ln1g_ref, ln1b_ref, wqkv_ref, bqkv_ref,
                      wo_ref, bo_ref, ln2g_ref, ln2b_ref,
                      w1_ref, b1_ref, w2_ref, b2_ref, o_ref):
    f32 = jnp.float32
    x = x_ref[...]                                   # (BS, H) float32
    keep = keep_ref[...]                             # (BS, BS) float32 in {0,1}

    # --- LN1 + fused QKV projection: one (BS,H)@(H,3H) matmul for whole batch
    xn = _layer_norm(x, ln1g_ref[...].astype(f32), ln1b_ref[...].astype(f32))
    kqv = jnp.dot(xn, wqkv_ref[...].astype(f32),
                  preferred_element_type=f32) + bqkv_ref[...].astype(f32)

    # --- causal multi-head attention, all heads batched.
    # attentionLL channel layout along the last axis is (three, head, head_size):
    #   Q = cols [0:H), K = cols [H:2H), V = cols [2H:3H).
    def head_major(base):                            # -> (NUM_HEADS, BS, HEAD_SIZE)
        return jnp.stack(
            [kqv[:, base + n * HEAD_SIZE: base + (n + 1) * HEAD_SIZE]
             for n in range(NUM_HEADS)], axis=0)

    qh = head_major(0)
    kh = head_major(H)
    vh = head_major(2 * H)

    # scores[h, q, k] = <Q_q, K_k> / sqrt(hs); softmax over the lane (key) axis.
    scores = jnp.einsum('hqd,hkd->hqk', qh, kh,
                        preferred_element_type=f32) * (1.0 / math.sqrt(HEAD_SIZE))
    # Block-diagonal causal mask (batch is folded into the position axis):
    # masked entries become exactly -10000.0, matching torch's
    # triu(scores) + (-10000)*tril(ones, -1); cross-batch entries underflow to
    # exact zeros after exp, so folding the batch is bit-equivalent.
    scores = scores * keep + (-10000.0) * (1.0 - keep)
    scores = scores - jnp.max(scores, axis=-1, keepdims=True)
    p = jnp.exp(scores)
    p = p * pl.reciprocal(jnp.sum(p, axis=-1, keepdims=True), approx=True)
    ctx = jnp.einsum('hqk,hkd->hqd', p, vh, preferred_element_type=f32)

    # concat heads -> single (BS,H)@(H,H) output projection (outputLL)
    ctx2d = jnp.concatenate([ctx[n] for n in range(NUM_HEADS)], axis=-1)
    attn = jnp.dot(ctx2d, wo_ref[...].astype(f32),
                   preferred_element_type=f32) + bo_ref[...].astype(f32)

    x1 = x + attn                                    # residual 1

    # --- LN2 + MLP with exact (erf-based) GELU
    x2n = _layer_norm(x1, ln2g_ref[...].astype(f32), ln2b_ref[...].astype(f32))
    hid = jnp.dot(x2n, w1_ref[...].astype(f32),
                  preferred_element_type=f32) + b1_ref[...].astype(f32)
    hid = 0.5 * hid * (1.0 + jax.lax.erf(hid * (1.0 / math.sqrt(2.0))))
    mlp = jnp.dot(hid, w2_ref[...].astype(f32),
                  preferred_element_type=f32) + b2_ref[...].astype(f32)

    o_ref[...] = (x1 + mlp).astype(o_ref.dtype)      # residual 2, one (BS,H) store


# ------------------------------ wrapper --------------------------------------
def gpt2_block(x, params):
    b, s, h = x.shape
    x2d = x.reshape(b * s, h)                        # fold batch into one slab
    # keep[i, j] = 1 iff token j is a valid (same-batch, key<=query) key for i.
    pos = jnp.arange(b * s, dtype=jnp.int32)
    keep = ((pos[:, None] // s == pos[None, :] // s) &
            (pos[:, None] >= pos[None, :])).astype(jnp.float32)

    vmem = pl.BlockSpec(memory_space=pltpu.MemorySpace.VMEM)
    out2d = pl.pallas_call(
        gpt2_block_kernel,
        out_shape=jax.ShapeDtypeStruct((b * s, h), jnp.float32),
        in_specs=[vmem] * (2 + len(params)),
        out_specs=vmem,
        compiler_params=pltpu.CompilerParams(
            vmem_limit_bytes=32 * 1024 * 1024),
    )(x2d, keep, *params)
    return out2d.reshape(b, s, h)


# --------------------------- pure-JAX reference ------------------------------
def ref_gpt2_block(x, params):
    ln1g, ln1b, wqkv, bqkv, wo, bo, ln2g, ln2b, w1, b1, w2, b2 = [
        p.astype(jnp.float32) for p in params]

    def ln(z, g, bta):
        mu = z.mean(-1, keepdims=True)
        var = ((z - mu) ** 2).mean(-1, keepdims=True)
        return (z - mu) / jnp.sqrt(var + EPS) * g[0] + bta[0]

    bsz, s, h = x.shape
    xn = ln(x, ln1g, ln1b)
    kqv = xn @ wqkv + bqkv[0]
    kqv = kqv.reshape(bsz, s, 3, NUM_HEADS, HEAD_SIZE).transpose(0, 3, 1, 4, 2)
    Q, K, V = kqv[..., 0], kqv[..., 1], kqv[..., 2]
    att = jnp.einsum('bnsh,bnth->bnst', K, Q) / math.sqrt(HEAD_SIZE)
    s_i = jnp.arange(s)[:, None]
    t_i = jnp.arange(s)[None, :]
    att = jnp.where(s_i <= t_i, att, -10000.0)
    att = jax.nn.softmax(att, axis=2)
    out = jnp.einsum('bnkq,bnkh->bnqh', att, V)
    out = out.transpose(0, 2, 1, 3).reshape(bsz, s, h) @ wo + bo[0]
    x1 = x + out
    x2n = ln(x1, ln2g, ln2b)
    hid = x2n @ w1 + b1[0]
    hid = 0.5 * hid * (1.0 + jax.lax.erf(hid / math.sqrt(2.0)))
    return x1 + (hid @ w2 + b2[0])


# ------------------------------- main -----------------------------------------
if __name__ == "__main__":
    key = jax.random.PRNGKey(0)
    ks = jax.random.split(key, 16)

    def rnd(k, shape, scale=0.02):
        return scale * jax.random.normal(k, shape, jnp.float32)

    params_f32 = (
        1.0 + rnd(ks[0], (1, H)),      # ln1 gamma
        rnd(ks[1], (1, H)),            # ln1 beta
        rnd(ks[2], (H, 3 * H), 0.05),  # attentionLL weight (in, out)
        rnd(ks[3], (1, 3 * H)),        # attentionLL bias
        rnd(ks[4], (H, H), 0.05),      # outputLL weight
        rnd(ks[5], (1, H)),            # outputLL bias
        1.0 + rnd(ks[6], (1, H)),      # ln2 gamma
        rnd(ks[7], (1, H)),            # ln2 beta
        rnd(ks[8], (H, FF), 0.05),     # linear1 weight
        rnd(ks[9], (1, FF)),           # linear1 bias
        rnd(ks[10], (FF, H), 0.05),    # linear2 weight
        rnd(ks[11], (1, H)),           # linear2 bias
    )
    # bf16 weight storage (perf review): halves HBM->VMEM weight traffic; the
    # kernel casts back to f32 for all matmul accumulation / elementwise math,
    # and the reference uses the identical bf16-rounded values.
    params = tuple(p.astype(jnp.bfloat16) for p in params_f32)
    x = jax.random.normal(ks[12], (B, S, H), jnp.float32)

    y = gpt2_block(x, params)
    jax.block_until_ready(y)

    y_ref = ref_gpt2_block(x, params)
    # Tolerance relaxed 1e-4 -> 5e-4 solely to absorb the EUP approximate
    # reciprocal used for the softmax normalization (per perf review).
    np.testing.assert_allclose(np.asarray(y), np.asarray(y_ref),
                               rtol=5e-4, atol=5e-4)
    print("KERNEL_OK")
</pallas_src>

<mosaic_0001>
module attributes {stable_mosaic.version = 11 : i64} {
  func.func @gpt2_block_kernel(%arg0: memref<16x32xf32, #tpu.memory_space<vmem>>, %arg1: memref<16x16xf32, #tpu.memory_space<vmem>>, %arg2: memref<1x32xbf16, #tpu.memory_space<vmem>>, %arg3: memref<1x32xbf16, #tpu.memory_space<vmem>>, %arg4: memref<32x96xbf16, #tpu.memory_space<vmem>>, %arg5: memref<1x96xbf16, #tpu.memory_space<vmem>>, %arg6: memref<32x32xbf16, #tpu.memory_space<vmem>>, %arg7: memref<1x32xbf16, #tpu.memory_space<vmem>>, %arg8: memref<1x32xbf16, #tpu.memory_space<vmem>>, %arg9: memref<1x32xbf16, #tpu.memory_space<vmem>>, %arg10: memref<32x128xbf16, #tpu.memory_space<vmem>>, %arg11: memref<1x128xbf16, #tpu.memory_space<vmem>>, %arg12: memref<128x32xbf16, #tpu.memory_space<vmem>>, %arg13: memref<1x32xbf16, #tpu.memory_space<vmem>>, %arg14: memref<16x32xf32, #tpu.memory_space<vmem>>) attributes {dimension_semantics = [], scalar_prefetch = 0 : i64, scratch_operands = 0 : i64, tpu.core_type = #tpu.core_type<tc>} {
    %c0 = arith.constant 0 : index
    %c0_0 = arith.constant 0 : index
    %0 = vector.load %arg0[%c0, %c0_0] : memref<16x32xf32, #tpu.memory_space<vmem>>, vector<16x32xf32>
    %c0_1 = arith.constant 0 : index
    %c0_2 = arith.constant 0 : index
    %1 = vector.load %arg1[%c0_1, %c0_2] : memref<16x16xf32, #tpu.memory_space<vmem>>, vector<16x16xf32>
    %c0_3 = arith.constant 0 : index
    %c0_4 = arith.constant 0 : index
    %2 = vector.load %arg2[%c0_3, %c0_4] : memref<1x32xbf16, #tpu.memory_space<vmem>>, vector<1x32xbf16>
    %3 = arith.extf %2 : vector<1x32xbf16> to vector<1x32xf32>
    %c0_5 = arith.constant 0 : index
    %c0_6 = arith.constant 0 : index
    %4 = vector.load %arg3[%c0_5, %c0_6] : memref<1x32xbf16, #tpu.memory_space<vmem>>, vector<1x32xbf16>
    %5 = arith.extf %4 : vector<1x32xbf16> to vector<1x32xf32>
    %cst = arith.constant dense<0.000000e+00> : vector<16xf32>
    %6 = vector.multi_reduction <add>, %0, %cst [1] : vector<16x32xf32> to vector<16xf32>
    %7 = vector.shape_cast %6 : vector<16xf32> to vector<16x1xf32>
    %cst_7 = arith.constant 3.200000e+01 : f32
    %8 = vector.broadcast %cst_7 : f32 to vector<16x1xf32>
    %9 = arith.divf %7, %8 : vector<16x1xf32>
    %10 = vector.broadcast %9 : vector<16x1xf32> to vector<16x32xf32>
    %11 = arith.subf %0, %10 : vector<16x32xf32>
    %12 = arith.mulf %11, %11 : vector<16x32xf32>
    %cst_8 = arith.constant dense<0.000000e+00> : vector<16xf32>
    %13 = vector.multi_reduction <add>, %12, %cst_8 [1] : vector<16x32xf32> to vector<16xf32>
    %14 = vector.shape_cast %13 : vector<16xf32> to vector<16x1xf32>
    %cst_9 = arith.constant 3.200000e+01 : f32
    %15 = vector.broadcast %cst_9 : f32 to vector<16x1xf32>
    %16 = arith.divf %14, %15 : vector<16x1xf32>
    %17 = vector.broadcast %9 : vector<16x1xf32> to vector<16x32xf32>
    %18 = arith.subf %0, %17 : vector<16x32xf32>
    %cst_10 = arith.constant 9.99999974E-6 : f32
    %19 = vector.broadcast %cst_10 : f32 to vector<16x1xf32>
    %20 = arith.addf %16, %19 : vector<16x1xf32>
    %21 = math.rsqrt %20 : vector<16x1xf32>
    %22 = vector.broadcast %21 : vector<16x1xf32> to vector<16x32xf32>
    %23 = arith.mulf %18, %22 : vector<16x32xf32>
    %24 = vector.broadcast %3 : vector<1x32xf32> to vector<16x32xf32>
    %25 = arith.mulf %23, %24 : vector<16x32xf32>
    %26 = vector.broadcast %5 : vector<1x32xf32> to vector<16x32xf32>
    %27 = arith.addf %25, %26 : vector<16x32xf32>
    %c0_11 = arith.constant 0 : index
    %c0_12 = arith.constant 0 : index
    %28 = vector.load %arg4[%c0_11, %c0_12] : memref<32x96xbf16, #tpu.memory_space<vmem>>, vector<32x96xbf16>
    %29 = arith.extf %28 : vector<32x96xbf16> to vector<32x96xf32>
    %cst_13 = arith.constant dense<0.000000e+00> : vector<16x96xf32>
    %30 = tpu.matmul %27, %29, %cst_13 {dimension_numbers = #tpu.dot_dimension_numbers<[1], [0], [0], [1], [0, 0, 1, 1], [], []>} : vector<16x32xf32>, vector<32x96xf32>, vector<16x96xf32> -> vector<16x96xf32>
    %c0_14 = arith.constant 0 : index
    %c0_15 = arith.constant 0 : index
    %31 = vector.load %arg5[%c0_14, %c0_15] : memref<1x96xbf16, #tpu.memory_space<vmem>>, vector<1x96xbf16>
    %32 = arith.extf %31 : vector<1x96xbf16> to vector<1x96xf32>
    %33 = vector.broadcast %32 : vector<1x96xf32> to vector<16x96xf32>
    %34 = arith.addf %30, %33 : vector<16x96xf32>
    %35 = vector.extract_strided_slice %34 {offsets = [0, 0], sizes = [16, 8], strides = [1, 1]} : vector<16x96xf32> to vector<16x8xf32>
    %36 = vector.extract_strided_slice %34 {offsets = [0, 8], sizes = [16, 8], strides = [1, 1]} : vector<16x96xf32> to vector<16x8xf32>
    %37 = vector.extract_strided_slice %34 {offsets = [0, 16], sizes = [16, 8], strides = [1, 1]} : vector<16x96xf32> to vector<16x8xf32>
    %38 = vector.extract_strided_slice %34 {offsets = [0, 24], sizes = [16, 8], strides = [1, 1]} : vector<16x96xf32> to vector<16x8xf32>
    %39 = vector.shape_cast %35 : vector<16x8xf32> to vector<1x16x8xf32>
    %40 = vector.shape_cast %36 : vector<16x8xf32> to vector<1x16x8xf32>
    %41 = vector.shape_cast %37 : vector<16x8xf32> to vector<1x16x8xf32>
    %42 = vector.shape_cast %38 : vector<16x8xf32> to vector<1x16x8xf32>
    %43 = tpu.concatenate %39, %40, %41, %42 in 0 : vector<1x16x8xf32>, vector<1x16x8xf32>, vector<1x16x8xf32>, vector<1x16x8xf32> -> vector<4x16x8xf32>
    %44 = vector.extract_strided_slice %34 {offsets = [0, 32], sizes = [16, 8], strides = [1, 1]} : vector<16x96xf32> to vector<16x8xf32>
    %45 = vector.extract_strided_slice %34 {offsets = [0, 40], sizes = [16, 8], strides = [1, 1]} : vector<16x96xf32> to vector<16x8xf32>
    %46 = vector.extract_strided_slice %34 {offsets = [0, 48], sizes = [16, 8], strides = [1, 1]} : vector<16x96xf32> to vector<16x8xf32>
    %47 = vector.extract_strided_slice %34 {offsets = [0, 56], sizes = [16, 8], strides = [1, 1]} : vector<16x96xf32> to vector<16x8xf32>
    %48 = vector.shape_cast %44 : vector<16x8xf32> to vector<1x16x8xf32>
    %49 = vector.shape_cast %45 : vector<16x8xf32> to vector<1x16x8xf32>
    %50 = vector.shape_cast %46 : vector<16x8xf32> to vector<1x16x8xf32>
    %51 = vector.shape_cast %47 : vector<16x8xf32> to vector<1x16x8xf32>
    %52 = tpu.concatenate %48, %49, %50, %51 in 0 : vector<1x16x8xf32>, vector<1x16x8xf32>, vector<1x16x8xf32>, vector<1x16x8xf32> -> vector<4x16x8xf32>
    %53 = vector.extract_strided_slice %34 {offsets = [0, 64], sizes = [16, 8], strides = [1, 1]} : vector<16x96xf32> to vector<16x8xf32>
    %54 = vector.extract_strided_slice %34 {offsets = [0, 72], sizes = [16, 8], strides = [1, 1]} : vector<16x96xf32> to vector<16x8xf32>
    %55 = vector.extract_strided_slice %34 {offsets = [0, 80], sizes = [16, 8], strides = [1, 1]} : vector<16x96xf32> to vector<16x8xf32>
    %56 = vector.extract_strided_slice %34 {offsets = [0, 88], sizes = [16, 8], strides = [1, 1]} : vector<16x96xf32> to vector<16x8xf32>
    %57 = vector.shape_cast %53 : vector<16x8xf32> to vector<1x16x8xf32>
    %58 = vector.shape_cast %54 : vector<16x8xf32> to vector<1x16x8xf32>
    %59 = vector.shape_cast %55 : vector<16x8xf32> to vector<1x16x8xf32>
    %60 = vector.shape_cast %56 : vector<16x8xf32> to vector<1x16x8xf32>
    %61 = tpu.concatenate %57, %58, %59, %60 in 0 : vector<1x16x8xf32>, vector<1x16x8xf32>, vector<1x16x8xf32>, vector<1x16x8xf32> -> vector<4x16x8xf32>
    "tpu.trace_start"() <{level = 10 : i32, message = "hqd,hkd->hqk"}> : () -> ()
    %cst_16 = arith.constant dense<0.000000e+00> : vector<4x16x16xf32>
    %62 = tpu.matmul %43, %52, %cst_16 {dimension_numbers = #tpu.dot_dimension_numbers<[2], [2], [1], [1], [0, 0, 0, 1, 1, 1], [0], [0]>} : vector<4x16x8xf32>, vector<4x16x8xf32>, vector<4x16x16xf32> -> vector<4x16x16xf32>
    "tpu.trace_stop"() : () -> ()
    %cst_17 = arith.constant 0.353553385 : f32
    %63 = vector.broadcast %cst_17 : f32 to vector<4x16x16xf32>
    %64 = arith.mulf %62, %63 : vector<4x16x16xf32>
    %65 = vector.shape_cast %1 : vector<16x16xf32> to vector<1x16x16xf32>
    %66 = vector.broadcast %65 : vector<1x16x16xf32> to vector<4x16x16xf32>
    %67 = arith.mulf %64, %66 : vector<4x16x16xf32>
    %cst_18 = arith.constant 1.000000e+00 : f32
    %68 = vector.broadcast %cst_18 : f32 to vector<16x16xf32>
    %69 = arith.subf %68, %1 : vector<16x16xf32>
    %cst_19 = arith.constant -1.000000e+04 : f32
    %70 = vector.broadcast %cst_19 : f32 to vector<16x16xf32>
    %71 = arith.mulf %70, %69 : vector<16x16xf32>
    %72 = vector.shape_cast %71 : vector<16x16xf32> to vector<1x16x16xf32>
    %73 = vector.broadcast %72 : vector<1x16x16xf32> to vector<4x16x16xf32>
    %74 = arith.addf %67, %73 : vector<4x16x16xf32>
    %cst_20 = arith.constant dense<0xFF800000> : vector<4x16xf32>
    %75 = vector.multi_reduction <maximumf>, %74, %cst_20 [2] : vector<4x16x16xf32> to vector<4x16xf32>
    %76 = vector.shape_cast %75 : vector<4x16xf32> to vector<4x16x1xf32>
    %77 = vector.broadcast %76 : vector<4x16x1xf32> to vector<4x16x16xf32>
    %78 = arith.subf %74, %77 : vector<4x16x16xf32>
    %79 = math.exp %78 : vector<4x16x16xf32>
    %cst_21 = arith.constant dense<0.000000e+00> : vector<4x16xf32>
    %80 = vector.multi_reduction <add>, %79, %cst_21 [2] : vector<4x16x16xf32> to vector<4x16xf32>
    %81 = vector.shape_cast %80 : vector<4x16xf32> to vector<4x16x1xf32>
    %82 = tpu.reciprocal %81 {approx = true} : vector<4x16x1xf32> -> vector<4x16x1xf32>
    %83 = vector.broadcast %82 : vector<4x16x1xf32> to vector<4x16x16xf32>
    %84 = arith.mulf %79, %83 : vector<4x16x16xf32>
    "tpu.trace_start"() <{level = 10 : i32, message = "hqk,hkd->hqd"}> : () -> ()
    %cst_22 = arith.constant dense<0.000000e+00> : vector<4x16x8xf32>
    %85 = tpu.matmul %84, %61, %cst_22 {dimension_numbers = #tpu.dot_dimension_numbers<[2], [1], [1], [2], [0, 0, 0, 1, 1, 2], [0], [0]>} : vector<4x16x16xf32>, vector<4x16x8xf32>, vector<4x16x8xf32> -> vector<4x16x8xf32>
    "tpu.trace_stop"() : () -> ()
    %86 = vector.extract_strided_slice %85 {offsets = [0, 0, 0], sizes = [1, 16, 8], strides = [1, 1, 1]} : vector<4x16x8xf32> to vector<1x16x8xf32>
    %87 = vector.shape_cast %86 : vector<1x16x8xf32> to vector<16x8xf32>
    %88 = vector.extract_strided_slice %85 {offsets = [1, 0, 0], sizes = [1, 16, 8], strides = [1, 1, 1]} : vector<4x16x8xf32> to vector<1x16x8xf32>
    %89 = vector.shape_cast %88 : vector<1x16x8xf32> to vector<16x8xf32>
    %90 = vector.extract_strided_slice %85 {offsets = [2, 0, 0], sizes = [1, 16, 8], strides = [1, 1, 1]} : vector<4x16x8xf32> to vector<1x16x8xf32>
    %91 = vector.shape_cast %90 : vector<1x16x8xf32> to vector<16x8xf32>
    %92 = vector.extract_strided_slice %85 {offsets = [3, 0, 0], sizes = [1, 16, 8], strides = [1, 1, 1]} : vector<4x16x8xf32> to vector<1x16x8xf32>
    %93 = vector.shape_cast %92 : vector<1x16x8xf32> to vector<16x8xf32>
    %94 = tpu.concatenate %87, %89, %91, %93 in 1 : vector<16x8xf32>, vector<16x8xf32>, vector<16x8xf32>, vector<16x8xf32> -> vector<16x32xf32>
    %c0_23 = arith.constant 0 : index
    %c0_24 = arith.constant 0 : index
    %95 = vector.load %arg6[%c0_23, %c0_24] : memref<32x32xbf16, #tpu.memory_space<vmem>>, vector<32x32xbf16>
    %96 = arith.extf %95 : vector<32x32xbf16> to vector<32x32xf32>
    %cst_25 = arith.constant dense<0.000000e+00> : vector<16x32xf32>
    %97 = tpu.matmul %94, %96, %cst_25 {dimension_numbers = #tpu.dot_dimension_numbers<[1], [0], [0], [1], [0, 0, 1, 1], [], []>} : vector<16x32xf32>, vector<32x32xf32>, vector<16x32xf32> -> vector<16x32xf32>
    %c0_26 = arith.constant 0 : index
    %c0_27 = arith.constant 0 : index
    %98 = vector.load %arg7[%c0_26, %c0_27] : memref<1x32xbf16, #tpu.memory_space<vmem>>, vector<1x32xbf16>
    %99 = arith.extf %98 : vector<1x32xbf16> to vector<1x32xf32>
    %100 = vector.broadcast %99 : vector<1x32xf32> to vector<16x32xf32>
    %101 = arith.addf %97, %100 : vector<16x32xf32>
    %102 = arith.addf %0, %101 : vector<16x32xf32>
    %c0_28 = arith.constant 0 : index
    %c0_29 = arith.constant 0 : index
    %103 = vector.load %arg8[%c0_28, %c0_29] : memref<1x32xbf16, #tpu.memory_space<vmem>>, vector<1x32xbf16>
    %104 = arith.extf %103 : vector<1x32xbf16> to vector<1x32xf32>
    %c0_30 = arith.constant 0 : index
    %c0_31 = arith.constant 0 : index
    %105 = vector.load %arg9[%c0_30, %c0_31] : memref<1x32xbf16, #tpu.memory_space<vmem>>, vector<1x32xbf16>
    %106 = arith.extf %105 : vector<1x32xbf16> to vector<1x32xf32>
    %cst_32 = arith.constant dense<0.000000e+00> : vector<16xf32>
    %107 = vector.multi_reduction <add>, %102, %cst_32 [1] : vector<16x32xf32> to vector<16xf32>
    %108 = vector.shape_cast %107 : vector<16xf32> to vector<16x1xf32>
    %cst_33 = arith.constant 3.200000e+01 : f32
    %109 = vector.broadcast %cst_33 : f32 to vector<16x1xf32>
    %110 = arith.divf %108, %109 : vector<16x1xf32>
    %111 = vector.broadcast %110 : vector<16x1xf32> to vector<16x32xf32>
    %112 = arith.subf %102, %111 : vector<16x32xf32>
    %113 = arith.mulf %112, %112 : vector<16x32xf32>
    %cst_34 = arith.constant dense<0.000000e+00> : vector<16xf32>
    %114 = vector.multi_reduction <add>, %113, %cst_34 [1] : vector<16x32xf32> to vector<16xf32>
    %115 = vector.shape_cast %114 : vector<16xf32> to vector<16x1xf32>
    %cst_35 = arith.constant 3.200000e+01 : f32
    %116 = vector.broadcast %cst_35 : f32 to vector<16x1xf32>
    %117 = arith.divf %115, %116 : vector<16x1xf32>
    %118 = vector.broadcast %110 : vector<16x1xf32> to vector<16x32xf32>
    %119 = arith.subf %102, %118 : vector<16x32xf32>
    %cst_36 = arith.constant 9.99999974E-6 : f32
    %120 = vector.broadcast %cst_36 : f32 to vector<16x1xf32>
    %121 = arith.addf %117, %120 : vector<16x1xf32>
    %122 = math.rsqrt %121 : vector<16x1xf32>
    %123 = vector.broadcast %122 : vector<16x1xf32> to vector<16x32xf32>
    %124 = arith.mulf %119, %123 : vector<16x32xf32>
    %125 = vector.broadcast %104 : vector<1x32xf32> to vector<16x32xf32>
    %126 = arith.mulf %124, %125 : vector<16x32xf32>
    %127 = vector.broadcast %106 : vector<1x32xf32> to vector<16x32xf32>
    %128 = arith.addf %126, %127 : vector<16x32xf32>
    %c0_37 = arith.constant 0 : index
    %c0_38 = arith.constant 0 : index
    %129 = vector.load %arg10[%c0_37, %c0_38] : memref<32x128xbf16, #tpu.memory_space<vmem>>, vector<32x128xbf16>
    %130 = arith.extf %129 : vector<32x128xbf16> to vector<32x128xf32>
    %cst_39 = arith.constant dense<0.000000e+00> : vector<16x128xf32>
    %131 = tpu.matmul %128, %130, %cst_39 {dimension_numbers = #tpu.dot_dimension_numbers<[1], [0], [0], [1], [0, 0, 1, 1], [], []>} : vector<16x32xf32>, vector<32x128xf32>, vector<16x128xf32> -> vector<16x128xf32>
    %c0_40 = arith.constant 0 : index
    %c0_41 = arith.constant 0 : index
    %132 = vector.load %arg11[%c0_40, %c0_41] : memref<1x128xbf16, #tpu.memory_space<vmem>>, vector<1x128xbf16>
    %133 = arith.extf %132 : vector<1x128xbf16> to vector<1x128xf32>
    %134 = vector.broadcast %133 : vector<1x128xf32> to vector<16x128xf32>
    %135 = arith.addf %131, %134 : vector<16x128xf32>
    %cst_42 = arith.constant 5.000000e-01 : f32
    %136 = vector.broadcast %cst_42 : f32 to vector<16x128xf32>
    %137 = arith.mulf %136, %135 : vector<16x128xf32>
    %cst_43 = arith.constant 0.707106769 : f32
    %138 = vector.broadcast %cst_43 : f32 to vector<16x128xf32>
    %139 = arith.mulf %135, %138 : vector<16x128xf32>
    %140 = math.erf %139 : vector<16x128xf32>
    %cst_44 = arith.constant 1.000000e+00 : f32
    %141 = vector.broadcast %cst_44 : f32 to vector<16x128xf32>
    %142 = arith.addf %141, %140 : vector<16x128xf32>
    %143 = arith.mulf %137, %142 : vector<16x128xf32>
    %c0_45 = arith.constant 0 : index
    %c0_46 = arith.constant 0 : index
    %144 = vector.load %arg12[%c0_45, %c0_46] : memref<128x32xbf16, #tpu.memory_space<vmem>>, vector<128x32xbf16>
    %145 = arith.extf %144 : vector<128x32xbf16> to vector<128x32xf32>
    %cst_47 = arith.constant dense<0.000000e+00> : vector<16x32xf32>
    %146 = tpu.matmul %143, %145, %cst_47 {dimension_numbers = #tpu.dot_dimension_numbers<[1], [0], [0], [1], [0, 0, 1, 1], [], []>} : vector<16x128xf32>, vector<128x32xf32>, vector<16x32xf32> -> vector<16x32xf32>
    %c0_48 = arith.constant 0 : index
    %c0_49 = arith.constant 0 : index
    %147 = vector.load %arg13[%c0_48, %c0_49] : memref<1x32xbf16, #tpu.memory_space<vmem>>, vector<1x32xbf16>
    %148 = arith.extf %147 : vector<1x32xbf16> to vector<1x32xf32>
    %149 = vector.broadcast %148 : vector<1x32xf32> to vector<16x32xf32>
    %150 = arith.addf %146, %149 : vector<16x32xf32>
    %151 = arith.addf %102, %150 : vector<16x32xf32>
    %c0_50 = arith.constant 0 : index
    %c0_51 = arith.constant 0 : index
    %152 = vector.load %arg14[%c0_50, %c0_51] : memref<16x32xf32, #tpu.memory_space<vmem>>, vector<16x32xf32>
    tpu.vector_store %arg14[%c0_50, %c0_51], %151 {strides = array<i32>} : memref<16x32xf32, #tpu.memory_space<vmem>>, vector<16x32xf32>,
    return
  }
}

</mosaic_0001>

<llo_original>
// kernel: tpu_custom_call.1
$region0: #{tpu_custom_call.1}
  #allocation0 [shape = 'u32[]', space=smem, size = 0x4, offset = 0x4, fixed_abs, tag = 'smem constant byte address 0x4 - core index']
  #allocation1 [shape = 'u32[144,128]{1,0:T(1,128)}', space=vmem, size = 0x12000, scoped, tag = 'internal scratch']
  %s0 = inlined_call_operand.vmem [shape: f32[16,32], index: 0, kind: input, shape index: {}]
  %s1 = inlined_call_operand.vmem [shape: f32[16,16], index: 1, kind: input, shape index: {}]
  %s2 = inlined_call_operand.vmem [shape: bf16[1,32], index: 2, kind: input, shape index: {}]
  %s3 = inlined_call_operand.vmem [shape: bf16[1,32], index: 3, kind: input, shape index: {}]
  %s4 = inlined_call_operand.vmem [shape: bf16[32,96], index: 4, kind: input, shape index: {}]
  %s5 = inlined_call_operand.vmem [shape: bf16[1,96], index: 5, kind: input, shape index: {}]
  %s6 = inlined_call_operand.vmem [shape: bf16[32,32], index: 6, kind: input, shape index: {}]
  %s7 = inlined_call_operand.vmem [shape: bf16[1,32], index: 7, kind: input, shape index: {}]
  %s8 = inlined_call_operand.vmem [shape: bf16[1,32], index: 8, kind: input, shape index: {}]
  %s9 = inlined_call_operand.vmem [shape: bf16[1,32], index: 9, kind: input, shape index: {}]
  %s10 = inlined_call_operand.vmem [shape: bf16[32,128], index: 10, kind: input, shape index: {}]
  %s11 = inlined_call_operand.vmem [shape: bf16[1,128], index: 11, kind: input, shape index: {}]
  %s12 = inlined_call_operand.vmem [shape: bf16[128,32], index: 12, kind: input, shape index: {}]
  %s13 = inlined_call_operand.vmem [shape: bf16[1,32], index: 13, kind: input, shape index: {}]
  %s14 = inlined_call_operand.hbm [shape: f32[16,32], index: 14, kind: output, shape index: {}]
  %s15 = sld [smem:[#allocation0]]
  $region66: #{tpu_custom_call.1} parent=0
    _
  %s17 = ssub.s32 1, %s15
  %s18 = scalar_select 0, %s17, %s15
  $region1: #{tpu_custom_call.1} parent=0
    #allocation2 [shape = 'u8[8192]{0}', space=vmem, size = 0x2000, scoped, tag = 'output window, operand 0, single buffered']
    #allocation3 [shape = 's32[1]{0}', space=sflag, size = 0x4, scoped, tag = 'scoped memory for tpu_custom_call.1']
    %19 = vsyncpa [#allocation3], 0
    // Predicated region
    $region2: #{tpu_custom_call.1} parent=1 // pred_check
      _
    $region3: #{tpu_custom_call.1} parent=1 // pred_check_branch
      %21 = sbr.rel (0) target = $region5
    $region4: #{tpu_custom_call.1} parent=1 // pred_region
      _
    $region5: #{tpu_custom_call.1} parent=1 // pred_fallthru
      _
    // Predicated region
    $region6: #{tpu_custom_call.1} parent=1 // pred_check
      _
    $region7: #{tpu_custom_call.1} parent=1 // pred_check_branch
      %23 = sbr.rel (0) target = $region9
    $region8: #{tpu_custom_call.1} parent=1 // pred_region
      _
    $region9: #{tpu_custom_call.1} parent=1 // pred_fallthru
      _
    // Predicated region
    $region10: #{tpu_custom_call.1} parent=1 // pred_check
      _
    $region11: #{tpu_custom_call.1} parent=1 // pred_check_branch
      %25 = sbr.rel (0) target = $region13
    $region12: #{tpu_custom_call.1} parent=1 // pred_region
      _
    $region13: #{tpu_custom_call.1} parent=1 // pred_fallthru
      _
    // Predicated region
    $region14: #{tpu_custom_call.1} parent=1 // pred_check
      _
    $region15: #{tpu_custom_call.1} parent=1 // pred_check_branch
      %27 = sbr.rel (0) target = $region17
    $region16: #{tpu_custom_call.1} parent=1 // pred_region
      _
    $region17: #{tpu_custom_call.1} parent=1 // pred_fallthru
      _
    // Predicated region
    $region18: #{tpu_custom_call.1} parent=1 // pred_check
      _
    $region19: #{tpu_custom_call.1} parent=1 // pred_check_branch
      %29 = sbr.rel (0) target = $region21
    $region20: #{tpu_custom_call.1} parent=1 // pred_region
      _
    $region21: #{tpu_custom_call.1} parent=1 // pred_fallthru
      _
    // Predicated region
    $region22: #{tpu_custom_call.1} parent=1 // pred_check
      _
    $region23: #{tpu_custom_call.1} parent=1 // pred_check_branch
      %31 = sbr.rel (0) target = $region25
    $region24: #{tpu_custom_call.1} parent=1 // pred_region
      _
    $region25: #{tpu_custom_call.1} parent=1 // pred_fallthru
      _
    // Predicated region
    $region26: #{tpu_custom_call.1} parent=1 // pred_check
      _
    $region27: #{tpu_custom_call.1} parent=1 // pred_check_branch
      %33 = sbr.rel (0) target = $region29
    $region28: #{tpu_custom_call.1} parent=1 // pred_region
      _
    $region29: #{tpu_custom_call.1} parent=1 // pred_fallthru
      _
    // Predicated region
    $region30: #{tpu_custom_call.1} parent=1 // pred_check
      _
    $region31: #{tpu_custom_call.1} parent=1 // pred_check_branch
      %35 = sbr.rel (0) target = $region33
    $region32: #{tpu_custom_call.1} parent=1 // pred_region
      _
    $region33: #{tpu_custom_call.1} parent=1 // pred_fallthru
      _
    // Predicated region
    $region34: #{tpu_custom_call.1} parent=1 // pred_check
      _
    $region35: #{tpu_custom_call.1} parent=1 // pred_check_branch
      %37 = sbr.rel (0) target = $region37
    $region36: #{tpu_custom_call.1} parent=1 // pred_region
      _
    $region37: #{tpu_custom_call.1} parent=1 // pred_fallthru
      _
    // Predicated region
    $region38: #{tpu_custom_call.1} parent=1 // pred_check
      _
    $region39: #{tpu_custom_call.1} parent=1 // pred_check_branch
      %39 = sbr.rel (0) target = $region41
    $region40: #{tpu_custom_call.1} parent=1 // pred_region
      _
    $region41: #{tpu_custom_call.1} parent=1 // pred_fallthru
      _
    // Predicated region
    $region42: #{tpu_custom_call.1} parent=1 // pred_check
      _
    $region43: #{tpu_custom_call.1} parent=1 // pred_check_branch
      %41 = sbr.rel (0) target = $region45
    $region44: #{tpu_custom_call.1} parent=1 // pred_region
      _
    $region45: #{tpu_custom_call.1} parent=1 // pred_fallthru
      _
    // Predicated region
    $region46: #{tpu_custom_call.1} parent=1 // pred_check
      _
    $region47: #{tpu_custom_call.1} parent=1 // pred_check_branch
      %43 = sbr.rel (0) target = $region49
    $region48: #{tpu_custom_call.1} parent=1 // pred_region
      _
    $region49: #{tpu_custom_call.1} parent=1 // pred_fallthru
      _
    // Predicated region
    $region50: #{tpu_custom_call.1} parent=1 // pred_check
      _
    $region51: #{tpu_custom_call.1} parent=1 // pred_check_branch
      %45 = sbr.rel (0) target = $region53
    $region52: #{tpu_custom_call.1} parent=1 // pred_region
      _
    $region53: #{tpu_custom_call.1} parent=1 // pred_fallthru
      _
    // Predicated region
    $region54: #{tpu_custom_call.1} parent=1 // pred_check
      _
    $region55: #{tpu_custom_call.1} parent=1 // pred_check_branch
      %47 = sbr.rel (0) target = $region57
    $region56: #{tpu_custom_call.1} parent=1 // pred_region
      _
    $region57: #{tpu_custom_call.1} parent=1 // pred_fallthru
      _
    %v48 = vld [vmem:[%s0] sm:$0xff]
    %v49 = vld [vmem:[%s0 + $0x8] sm:$0xff]
    %v50 = vld [vmem:[%s1] sm:$0xff]
    %v51 = vld [vmem:[%s1 + $0x8] sm:$0xff]
    %v52 = vld [vmem:[%s2] sm:$0x1]
    %v53 = vunpack.c.l.bf16 %v52
    %v54 = vld [vmem:[%s3] sm:$0x1]
    %v55 = vunpack.c.l.bf16 %v54
    %vm56 = vcmask 261120
    %v57 = vsel %vm56, %v48, 0.0
    %58 = vadd.xlane.f32.xlu0 %v57
    %v59 = vpop.xlane.xlu0 %58
    %v60 = vsel %vm56, %v49, 0.0
    %61 = vadd.xlane.f32.xlu0 %v60
    %v62 = vpop.xlane.xlu0 %61
    %v63 = vrcp.pop 32.0
    %v64 = vmul.f32 %v59, %v63
    %v65 = vmul.f32 %v62, %v63
    %v66 = vsub.f32 %v48, %v64
    %v67 = vsub.f32 %v49, %v65
    %v68 = vmul.f32 %v66, %v66
    %v69 = vmul.f32 %v67, %v67
    %v70 = vsel %vm56, %v68, 0.0
    %71 = vadd.xlane.f32.xlu0 %v70
    %v72 = vpop.xlane.xlu0 %71
    %v73 = vsel %vm56, %v69, 0.0
    %74 = vadd.xlane.f32.xlu0 %v73
    %v75 = vpop.xlane.xlu0 %74
    %v76 = vmul.f32 %v72, %v63
    %v77 = vmul.f32 %v75, %v63
    %v78 = vadd.f32 %v76, 1e-05
    %v79 = vadd.f32 %v77, 1e-05
    %v80 = vrsqrt.pop %v78
    %v81 = vrsqrt.pop %v79
    %v82 = vmul.f32 %v66, %v80
    %v83 = vmul.f32 %v67, %v81
    %v84 = vlaneseq
    %v85 = vshrl.u32 %v84, 7
    %v86 = vsub.s32 0, %v85
    %v87 = vrot.slane %v53, %v86
    %v88 = vmul.f32 %v82, %v87
    %v89 = vmul.f32 %v83, %v87
    %v90 = vlaneseq
    %v91 = vshrl.u32 %v90, 7
    %v92 = vsub.s32 0, %v91
    %v93 = vrot.slane %v55, %v92
    %v94 = vadd.f32 %v88, %v93
    %v95 = vadd.f32 %v89, %v93
    %v96 = vld [vmem:[%s4] sm:$0xf]
    %v97 = vld [vmem:[%s4 + $0x4] sm:$0xf]
    %v98 = vld [vmem:[%s4 + $0x8] sm:$0xf]
    %v99 = vld [vmem:[%s4 + $0xc] sm:$0xf]
    %v100 = vunpack.c.l.bf16 %v96
    %v101 = vunpack.c.l.bf16 %v97
    %v102 = vunpack.c.l.bf16 %v98
    %v103 = vunpack.c.l.bf16 %v99
    %v104 = vld [vmem:[%s5] sm:$0x1]
    %v105 = vunpack.c.l.bf16 %v104
    %v106 = vlaneseq
    %v107 = vshrl.u32 %v106, 7
    %v108 = vsub.s32 0, %v107
    %v109 = vrot.slane %v105, %v108
    %v111 = vsel %vm56, %v94, 0
    %v114 = vsel %vm56, %v95, 0
    %116 = vmatprep.subr.mxu0 0.0
    %117 = vmatpush1.msra.mxu0 %v100
    %118 = vmatprep.subr.mxu0 0.0
    %119 = vmatpush1.msra.mxu0 %v101
    %120 = vmatprep.subr.mxu0 0.0
    %121 = vmatpush1.msra.mxu0 %v102
    %122 = vmatprep.subr.mxu0 0.0
    %123 = vmatpush1.msra.mxu0 %v103
    %124 = vmatprep.subr.mxu0 0.0
    %125 = vmatpush1.msra.mxu0 0.0
    %126 = vmatprep.subr.mxu0 0.0
    %127 = vmatpush1.msra.mxu0 0.0
    %128 = vmatprep.subr.mxu0 0.0
    %129 = vmatpush1.msra.mxu0 0.0
    %130 = vmatprep.subr.mxu0 0.0
    %131 = vmatpush1.msra.mxu0 0.0
    %132 = vmatprep.subr.mxu0 0.0
    %133 = vmatpush1.msra.mxu0 0.0
    %134 = vmatprep.subr.mxu0 0.0
    %135 = vmatpush1.msra.mxu0 0.0
    %136 = vmatprep.subr.mxu0 0.0
    %137 = vmatpush1.msra.mxu0 0.0
    %138 = vmatprep.subr.mxu0 0.0
    %139 = vmatpush1.msra.mxu0 0.0
    %140 = vmatprep.subr.mxu0 0.0
    %141 = vmatpush1.msra.mxu0 0.0
    %142 = vmatprep.subr.mxu0 0.0
    %143 = vmatpush1.msra.mxu0 0.0
    %144 = vmatprep.subr.mxu0 0.0
    %145 = vmatpush1.msra.mxu0 0.0
    %146 = vmatprep.subr.mxu0 0.0
    %147 = vmatpush1.msra.mxu0 0.0
    %148 = vmatprep.subr.mxu0 0.0
    %149 = vmatpush1.msra.mxu0 0.0
    %150 = vmatprep.subr.mxu0 0.0
    %151 = vmatpush1.msra.mxu0 0.0
    %152 = vmatprep.subr.mxu0 0.0
    %153 = vmatpush1.msra.mxu0 0.0
    %154 = vmatprep.subr.mxu0 0.0
    %155 = vmatpush1.msra.mxu0 0.0
    %156 = vmatprep.subr.mxu0 0.0
    %157 = vmatpush1.msra.mxu0 0.0
    %158 = vmatprep.subr.mxu0 0.0
    %159 = vmatpush1.msra.mxu0 0.0
    %160 = vmatprep.subr.mxu0 0.0
    %161 = vmatpush1.msra.mxu0 0.0
    %162 = vmatprep.subr.mxu0 0.0
    %163 = vmatpush1.msra.mxu0 0.0
    %164 = vmatprep.subr.mxu0 0.0
    %165 = vmatpush1.msra.mxu0 0.0
    %166 = vmatprep.subr.mxu0 0.0
    %167 = vmatpush1.msra.mxu0 0.0
    %168 = vmatprep.subr.mxu0 0.0
    %169 = vmatpush1.msra.mxu0 0.0
    %170 = vmatprep.subr.mxu0 0.0
    %171 = vmatpush1.msra.mxu0 0.0
    %172 = vmatprep.subr.mxu0 0.0
    %173 = vmatpush1.msra.mxu0 0.0
    %174 = vmatprep.subr.mxu0 0.0
    %175 = vmatpush1.msra.mxu0 0.0
    %176 = vmatprep.subr.mxu0 0.0
    %177 = vmatpush1.msra.mxu0 0.0
    %178 = vmatprep.subr.mxu0 0.0
    %179 = vmatpush1.msra.mxu0 0.0
    %180 = vmatprep.mubr.f32.mxu0 0.0
    %181 = vmatmul.mubr.f32.gmra.mrb[0].mxu0 %v111
    %v182 = vpop.f32.mrb[0].mxu0
    %v183 = vadd.f32 %v109, %v182
    %v184 = vpop.f32.mrb[0].mxu0
    %185 = vmatprep.mubr.f32.mxu0 0.0
    %186 = vmatmul.mubr.f32.gmra.mrb[0].mxu0 %v114
    %v187 = vpop.f32.mrb[0].mxu0
    %v188 = vadd.f32 %v109, %v187
    %v189 = vpop.f32.mrb[0].mxu0
    %190 = vdwg.mxu0
    %193 = vrot.lane.b32.xlu0 %v183, 120
    %v194 = vpop.permute.xlu0 %193
    %195 = vrot.lane.b32.xlu0 %v188, 120
    %v196 = vpop.permute.xlu0 %195
    %197 = vrot.lane.b32.xlu0 %v183, 112
    %v198 = vpop.permute.xlu0 %197
    %199 = vrot.lane.b32.xlu0 %v188, 112
    %v200 = vpop.permute.xlu0 %199
    %201 = vrot.lane.b32.xlu0 %v183, 104
    %v202 = vpop.permute.xlu0 %201
    %203 = vrot.lane.b32.xlu0 %v188, 104
    %v204 = vpop.permute.xlu0 %203
    %205 = vrot.lane.b32.xlu0 %v183, 96
    %v206 = vpop.permute.xlu0 %205
    %207 = vrot.lane.b32.xlu0 %v188, 96
    %v208 = vpop.permute.xlu0 %207
    %vm209 = vcmask 64512
    %v210 = vsel %vm209, %v183, 0
    %v212 = vsel %vm209, %v188, 0
    %v214 = vsel %vm209, %v206, 0
    %v216 = vsel %vm209, %v208, 0
    %218 = vmatprep.subr.mxu0 0.0
    %219 = vmatpush1.xpose.msra.mxu0 %v214
    %220 = vmatprep.subr.mxu0 0.0
    %221 = vmatpush1.xpose.msra.mxu0 %v216
    %222 = vmatprep.subr.mxu0 0.0
    %223 = vmatpush1.xpose.msra.mxu0 0.0
    %224 = vmatprep.subr.mxu0 0.0
    %225 = vmatpush1.xpose.msra.mxu0 0.0
    %226 = vmatprep.subr.mxu0 0.0
    %227 = vmatpush1.xpose.msra.mxu0 0.0
    %228 = vmatprep.subr.mxu0 0.0
    %229 = vmatpush1.xpose.msra.mxu0 0.0
    %230 = vmatprep.subr.mxu0 0.0
    %231 = vmatpush1.xpose.msra.mxu0 0.0
    %232 = vmatprep.subr.mxu0 0.0
    %233 = vmatpush1.xpose.msra.mxu0 0.0
    %234 = vmatprep.subr.mxu0 0.0
    %235 = vmatpush1.xpose.msra.mxu0 0.0
    %236 = vmatprep.subr.mxu0 0.0
    %237 = vmatpush1.xpose.msra.mxu0 0.0
    %238 = vmatprep.subr.mxu0 0.0
    %239 = vmatpush1.xpose.msra.mxu0 0.0
    %240 = vmatprep.subr.mxu0 0.0
    %241 = vmatpush1.xpose.msra.mxu0 0.0
    %242 = vmatprep.subr.mxu0 0.0
    %243 = vmatpush1.xpose.msra.mxu0 0.0
    %244 = vmatprep.subr.mxu0 0.0
    %245 = vmatpush1.xpose.msra.mxu0 0.0
    %246 = vmatprep.subr.mxu0 0.0
    %247 = vmatpush1.xpose.msra.mxu0 0.0
    %248 = vmatprep.subr.mxu0 0.0
    %249 = vmatpush1.xpose.msra.mxu0 0.0
    %250 = vmatprep.subr.mxu0 0.0
    %251 = vmatpush1.xpose.msra.mxu0 0.0
    %252 = vmatprep.subr.mxu0 0.0
    %253 = vmatpush1.xpose.msra.mxu0 0.0
    %254 = vmatprep.subr.mxu0 0.0
    %255 = vmatpush1.xpose.msra.mxu0 0.0
    %256 = vmatprep.subr.mxu0 0.0
    %257 = vmatpush1.xpose.msra.mxu0 0.0
    %258 = vmatprep.subr.mxu0 0.0
    %259 = vmatpush1.xpose.msra.mxu0 0.0
    %260 = vmatprep.subr.mxu0 0.0
    %261 = vmatpush1.xpose.msra.mxu0 0.0
    %262 = vmatprep.subr.mxu0 0.0
    %263 = vmatpush1.xpose.msra.mxu0 0.0
    %264 = vmatprep.subr.mxu0 0.0
    %265 = vmatpush1.xpose.msra.mxu0 0.0
    %266 = vmatprep.subr.mxu0 0.0
    %267 = vmatpush1.xpose.msra.mxu0 0.0
    %268 = vmatprep.subr.mxu0 0.0
    %269 = vmatpush1.xpose.msra.mxu0 0.0
    %270 = vmatprep.subr.mxu0 0.0
    %271 = vmatpush1.xpose.msra.mxu0 0.0
    %272 = vmatprep.subr.mxu0 0.0
    %273 = vmatpush1.xpose.msra.mxu0 0.0
    %274 = vmatprep.subr.mxu0 0.0
    %275 = vmatpush1.xpose.msra.mxu0 0.0
    %276 = vmatprep.subr.mxu0 0.0
    %277 = vmatpush1.xpose.msra.mxu0 0.0
    %278 = vmatprep.subr.mxu0 0.0
    %279 = vmatpush1.xpose.msra.mxu0 0.0
    %280 = vmatprep.subr.mxu0 0.0
    %281 = vmatpush1.xpose.msra.mxu0 0.0
    %282 = vmatprep.mubr.f32.mxu0 0.0
    %283 = vmatmul.mubr.f32.gmra.mrb[0].mxu0 %v210
    %v284 = vpop.f32.mrb[0].mxu0
    %v285 = vadd.f32 0.0, %v284
    %v286 = vpop.f32.mrb[0].mxu0
    %287 = vmatprep.mubr.f32.mxu0 0.0
    %288 = vmatmul.mubr.f32.gmra.mrb[0].mxu0 %v212
    %v289 = vpop.f32.mrb[0].mxu0
    %v290 = vadd.f32 0.0, %v289
    %v291 = vpop.f32.mrb[0].mxu0
    %292 = vdwg.mxu0
    %293 = vrot.lane.b32.xlu0 %v194, 96
    %v294 = vpop.permute.xlu0 %293
    %295 = vrot.lane.b32.xlu0 %v196, 96
    %v296 = vpop.permute.xlu0 %295
    %v297 = vsel %vm209, %v194, 0
    %v299 = vsel %vm209, %v196, 0
    %v301 = vsel %vm209, %v294, 0
    %v303 = vsel %vm209, %v296, 0
    %305 = vmatprep.subr.mxu0 0.0
    %306 = vmatpush1.xpose.msra.mxu0 %v301
    %307 = vmatprep.subr.mxu0 0.0
    %308 = vmatpush1.xpose.msra.mxu0 %v303
    %309 = vmatprep.subr.mxu0 0.0
    %310 = vmatpush1.xpose.msra.mxu0 0.0
    %311 = vmatprep.subr.mxu0 0.0
    %312 = vmatpush1.xpose.msra.mxu0 0.0
    %313 = vmatprep.subr.mxu0 0.0
    %314 = vmatpush1.xpose.msra.mxu0 0.0
    %315 = vmatprep.subr.mxu0 0.0
    %316 = vmatpush1.xpose.msra.mxu0 0.0
    %317 = vmatprep.subr.mxu0 0.0
    %318 = vmatpush1.xpose.msra.mxu0 0.0
    %319 = vmatprep.subr.mxu0 0.0
    %320 = vmatpush1.xpose.msra.mxu0 0.0
    %321 = vmatprep.subr.mxu0 0.0
    %322 = vmatpush1.xpose.msra.mxu0 0.0
    %323 = vmatprep.subr.mxu0 0.0
    %324 = vmatpush1.xpose.msra.mxu0 0.0
    %325 = vmatprep.subr.mxu0 0.0
    %326 = vmatpush1.xpose.msra.mxu0 0.0
    %327 = vmatprep.subr.mxu0 0.0
    %328 = vmatpush1.xpose.msra.mxu0 0.0
    %329 = vmatprep.subr.mxu0 0.0
    %330 = vmatpush1.xpose.msra.mxu0 0.0
    %331 = vmatprep.subr.mxu0 0.0
    %332 = vmatpush1.xpose.msra.mxu0 0.0
    %333 = vmatprep.subr.mxu0 0.0
    %334 = vmatpush1.xpose.msra.mxu0 0.0
    %335 = vmatprep.subr.mxu0 0.0
    %336 = vmatpush1.xpose.msra.mxu0 0.0
    %337 = vmatprep.subr.mxu0 0.0
    %338 = vmatpush1.xpose.msra.mxu0 0.0
    %339 = vmatprep.subr.mxu0 0.0
    %340 = vmatpush1.xpose.msra.mxu0 0.0
    %341 = vmatprep.subr.mxu0 0.0
    %342 = vmatpush1.xpose.msra.mxu0 0.0
    %343 = vmatprep.subr.mxu0 0.0
    %344 = vmatpush1.xpose.msra.mxu0 0.0
    %345 = vmatprep.subr.mxu0 0.0
    %346 = vmatpush1.xpose.msra.mxu0 0.0
    %347 = vmatprep.subr.mxu0 0.0
    %348 = vmatpush1.xpose.msra.mxu0 0.0
    %349 = vmatprep.subr.mxu0 0.0
    %350 = vmatpush1.xpose.msra.mxu0 0.0
    %351 = vmatprep.subr.mxu0 0.0
    %352 = vmatpush1.xpose.msra.mxu0 0.0
    %353 = vmatprep.subr.mxu0 0.0
    %354 = vmatpush1.xpose.msra.mxu0 0.0
    %355 = vmatprep.subr.mxu0 0.0
    %356 = vmatpush1.xpose.msra.mxu0 0.0
    %357 = vmatprep.subr.mxu0 0.0
    %358 = vmatpush1.xpose.msra.mxu0 0.0
    %359 = vmatprep.subr.mxu0 0.0
    %360 = vmatpush1.xpose.msra.mxu0 0.0
    %361 = vmatprep.subr.mxu0 0.0
    %362 = vmatpush1.xpose.msra.mxu0 0.0
    %363 = vmatprep.subr.mxu0 0.0
    %364 = vmatpush1.xpose.msra.mxu0 0.0
    %365 = vmatprep.subr.mxu0 0.0
    %366 = vmatpush1.xpose.msra.mxu0 0.0
    %367 = vmatprep.subr.mxu0 0.0
    %368 = vmatpush1.xpose.msra.mxu0 0.0
    %369 = vmatprep.mubr.f32.mxu0 0.0
    %370 = vmatmul.mubr.f32.gmra.mrb[0].mxu0 %v297
    %v371 = vpop.f32.mrb[0].mxu0
    %v372 = vadd.f32 0.0, %v371
    %v373 = vpop.f32.mrb[0].mxu0
    %374 = vmatprep.mubr.f32.mxu0 0.0
    %375 = vmatmul.mubr.f32.gmra.mrb[0].mxu0 %v299
    %v376 = vpop.f32.mrb[0].mxu0
    %v377 = vadd.f32 0.0, %v376
    %v378 = vpop.f32.mrb[0].mxu0
    %379 = vdwg.mxu0
    %380 = vrot.lane.b32.xlu0 %v198, 96
    %v381 = vpop.permute.xlu0 %380
    %382 = vrot.lane.b32.xlu0 %v200, 96
    %v383 = vpop.permute.xlu0 %382
    %v384 = vsel %vm209, %v198, 0
    %v386 = vsel %vm209, %v200, 0
    %v388 = vsel %vm209, %v381, 0
    %v390 = vsel %vm209, %v383, 0
    %392 = vmatprep.subr.mxu0 0.0
    %393 = vmatpush1.xpose.msra.mxu0 %v388
    %394 = vmatprep.subr.mxu0 0.0
    %395 = vmatpush1.xpose.msra.mxu0 %v390
    %396 = vmatprep.subr.mxu0 0.0
    %397 = vmatpush1.xpose.msra.mxu0 0.0
    %398 = vmatprep.subr.mxu0 0.0
    %399 = vmatpush1.xpose.msra.mxu0 0.0
    %400 = vmatprep.subr.mxu0 0.0
    %401 = vmatpush1.xpose.msra.mxu0 0.0
    %402 = vmatprep.subr.mxu0 0.0
    %403 = vmatpush1.xpose.msra.mxu0 0.0
    %404 = vmatprep.subr.mxu0 0.0
    %405 = vmatpush1.xpose.msra.mxu0 0.0
    %406 = vmatprep.subr.mxu0 0.0
    %407 = vmatpush1.xpose.msra.mxu0 0.0
    %408 = vmatprep.subr.mxu0 0.0
    %409 = vmatpush1.xpose.msra.mxu0 0.0
    %410 = vmatprep.subr.mxu0 0.0
    %411 = vmatpush1.xpose.msra.mxu0 0.0
    %412 = vmatprep.subr.mxu0 0.0
    %413 = vmatpush1.xpose.msra.mxu0 0.0
    %414 = vmatprep.subr.mxu0 0.0
    %415 = vmatpush1.xpose.msra.mxu0 0.0
    %416 = vmatprep.subr.mxu0 0.0
    %417 = vmatpush1.xpose.msra.mxu0 0.0
    %418 = vmatprep.subr.mxu0 0.0
    %419 = vmatpush1.xpose.msra.mxu0 0.0
    %420 = vmatprep.subr.mxu0 0.0
    %421 = vmatpush1.xpose.msra.mxu0 0.0
    %422 = vmatprep.subr.mxu0 0.0
    %423 = vmatpush1.xpose.msra.mxu0 0.0
    %424 = vmatprep.subr.mxu0 0.0
    %425 = vmatpush1.xpose.msra.mxu0 0.0
    %426 = vmatprep.subr.mxu0 0.0
    %427 = vmatpush1.xpose.msra.mxu0 0.0
    %428 = vmatprep.subr.mxu0 0.0
    %429 = vmatpush1.xpose.msra.mxu0 0.0
    %430 = vmatprep.subr.mxu0 0.0
    %431 = vmatpush1.xpose.msra.mxu0 0.0
    %432 = vmatprep.subr.mxu0 0.0
    %433 = vmatpush1.xpose.msra.mxu0 0.0
    %434 = vmatprep.subr.mxu0 0.0
    %435 = vmatpush1.xpose.msra.mxu0 0.0
    %436 = vmatprep.subr.mxu0 0.0
    %437 = vmatpush1.xpose.msra.mxu0 0.0
    %438 = vmatprep.subr.mxu0 0.0
    %439 = vmatpush1.xpose.msra.mxu0 0.0
    %440 = vmatprep.subr.mxu0 0.0
    %441 = vmatpush1.xpose.msra.mxu0 0.0
    %442 = vmatprep.subr.mxu0 0.0
    %443 = vmatpush1.xpose.msra.mxu0 0.0
    %444 = vmatprep.subr.mxu0 0.0
    %445 = vmatpush1.xpose.msra.mxu0 0.0
    %446 = vmatprep.subr.mxu0 0.0
    %447 = vmatpush1.xpose.msra.mxu0 0.0
    %448 = vmatprep.subr.mxu0 0.0
    %449 = vmatpush1.xpose.msra.mxu0 0.0
    %450 = vmatprep.subr.mxu0 0.0
    %451 = vmatpush1.xpose.msra.mxu0 0.0
    %452 = vmatprep.subr.mxu0 0.0
    %453 = vmatpush1.xpose.msra.mxu0 0.0
    %454 = vmatprep.subr.mxu0 0.0
    %455 = vmatpush1.xpose.msra.mxu0 0.0
    %456 = vmatprep.mubr.f32.mxu0 0.0
    %457 = vmatmul.mubr.f32.gmra.mrb[0].mxu0 %v384
    %v458 = vpop.f32.mrb[0].mxu0
    %v459 = vadd.f32 0.0, %v458
    %v460 = vpop.f32.mrb[0].mxu0
    %461 = vmatprep.mubr.f32.mxu0 0.0
    %462 = vmatmul.mubr.f32.gmra.mrb[0].mxu0 %v386
    %v463 = vpop.f32.mrb[0].mxu0
    %v464 = vadd.f32 0.0, %v463
    %v465 = vpop.f32.mrb[0].mxu0
    %466 = vdwg.mxu0
    %467 = vrot.lane.b32.xlu0 %v202, 96
    %v468 = vpop.permute.xlu0 %467
    %469 = vrot.lane.b32.xlu0 %v204, 96
    %v470 = vpop.permute.xlu0 %469
    %v471 = vsel %vm209, %v202, 0
    %v473 = vsel %vm209, %v204, 0
    %v475 = vsel %vm209, %v468, 0
    %v477 = vsel %vm209, %v470, 0
    %479 = vmatprep.subr.mxu0 0.0
    %480 = vmatpush1.xpose.msra.mxu0 %v475
    %481 = vmatprep.subr.mxu0 0.0
    %482 = vmatpush1.xpose.msra.mxu0 %v477
    %483 = vmatprep.subr.mxu0 0.0
    %484 = vmatpush1.xpose.msra.mxu0 0.0
    %485 = vmatprep.subr.mxu0 0.0
    %486 = vmatpush1.xpose.msra.mxu0 0.0
    %487 = vmatprep.subr.mxu0 0.0
    %488 = vmatpush1.xpose.msra.mxu0 0.0
    %489 = vmatprep.subr.mxu0 0.0
    %490 = vmatpush1.xpose.msra.mxu0 0.0
    %491 = vmatprep.subr.mxu0 0.0
    %492 = vmatpush1.xpose.msra.mxu0 0.0
    %493 = vmatprep.subr.mxu0 0.0
    %494 = vmatpush1.xpose.msra.mxu0 0.0
    %495 = vmatprep.subr.mxu0 0.0
    %496 = vmatpush1.xpose.msra.mxu0 0.0
    %497 = vmatprep.subr.mxu0 0.0
    %498 = vmatpush1.xpose.msra.mxu0 0.0
    %499 = vmatprep.subr.mxu0 0.0
    %500 = vmatpush1.xpose.msra.mxu0 0.0
    %501 = vmatprep.subr.mxu0 0.0
    %502 = vmatpush1.xpose.msra.mxu0 0.0
    %503 = vmatprep.subr.mxu0 0.0
    %504 = vmatpush1.xpose.msra.mxu0 0.0
    %505 = vmatprep.subr.mxu0 0.0
    %506 = vmatpush1.xpose.msra.mxu0 0.0
    %507 = vmatprep.subr.mxu0 0.0
    %508 = vmatpush1.xpose.msra.mxu0 0.0
    %509 = vmatprep.subr.mxu0 0.0
    %510 = vmatpush1.xpose.msra.mxu0 0.0
    %511 = vmatprep.subr.mxu0 0.0
    %512 = vmatpush1.xpose.msra.mxu0 0.0
    %513 = vmatprep.subr.mxu0 0.0
    %514 = vmatpush1.xpose.msra.mxu0 0.0
    %515 = vmatprep.subr.mxu0 0.0
    %516 = vmatpush1.xpose.msra.mxu0 0.0
    %517 = vmatprep.subr.mxu0 0.0
    %518 = vmatpush1.xpose.msra.mxu0 0.0
    %519 = vmatprep.subr.mxu0 0.0
    %520 = vmatpush1.xpose.msra.mxu0 0.0
    %521 = vmatprep.subr.mxu0 0.0
    %522 = vmatpush1.xpose.msra.mxu0 0.0
    %523 = vmatprep.subr.mxu0 0.0
    %524 = vmatpush1.xpose.msra.mxu0 0.0
    %525 = vmatprep.subr.mxu0 0.0
    %526 = vmatpush1.xpose.msra.mxu0 0.0
    %527 = vmatprep.subr.mxu0 0.0
    %528 = vmatpush1.xpose.msra.mxu0 0.0
    %529 = vmatprep.subr.mxu0 0.0
    %530 = vmatpush1.xpose.msra.mxu0 0.0
    %531 = vmatprep.subr.mxu0 0.0
    %532 = vmatpush1.xpose.msra.mxu0 0.0
    %533 = vmatprep.subr.mxu0 0.0
    %534 = vmatpush1.xpose.msra.mxu0 0.0
    %535 = vmatprep.subr.mxu0 0.0
    %536 = vmatpush1.xpose.msra.mxu0 0.0
    %537 = vmatprep.subr.mxu0 0.0
    %538 = vmatpush1.xpose.msra.mxu0 0.0
    %539 = vmatprep.subr.mxu0 0.0
    %540 = vmatpush1.xpose.msra.mxu0 0.0
    %541 = vmatprep.subr.mxu0 0.0
    %542 = vmatpush1.xpose.msra.mxu0 0.0
    %543 = vmatprep.mubr.f32.mxu0 0.0
    %544 = vmatmul.mubr.f32.gmra.mrb[0].mxu0 %v471
    %v545 = vpop.f32.mrb[0].mxu0
    %v546 = vadd.f32 0.0, %v545
    %v547 = vpop.f32.mrb[0].mxu0
    %548 = vmatprep.mubr.f32.mxu0 0.0
    %549 = vmatmul.mubr.f32.gmra.mrb[0].mxu0 %v473
    %v550 = vpop.f32.mrb[0].mxu0
    %v551 = vadd.f32 0.0, %v550
    %v552 = vpop.f32.mrb[0].mxu0
    %553 = vdwg.mxu0
    %v554 = vmul.f32 %v285, 0.35355338
    %v555 = vmul.f32 %v290, 0.35355338
    %v556 = vmul.f32 %v372, 0.35355338
    %v557 = vmul.f32 %v377, 0.35355338
    %v558 = vmul.f32 %v459, 0.35355338
    %v559 = vmul.f32 %v464, 0.35355338
    %v560 = vmul.f32 %v546, 0.35355338
    %v561 = vmul.f32 %v551, 0.35355338
    %v562 = vmul.f32 %v554, %v50
    %v563 = vmul.f32 %v555, %v51
    %v564 = vmul.f32 %v556, %v50
    %v565 = vmul.f32 %v557, %v51
    %v566 = vmul.f32 %v558, %v50
    %v567 = vmul.f32 %v559, %v51
    %v568 = vmul.f32 %v560, %v50
    %v569 = vmul.f32 %v561, %v51
    %v570 = vsub.f32 1.0, %v50
    %v571 = vsub.f32 1.0, %v51
    %v572 = vmul.f32 %v570, -10000.0
    %v573 = vmul.f32 %v571, -10000.0
    %v574 = vadd.f32 %v562, %v572
    %v575 = vadd.f32 %v563, %v573
    %v576 = vadd.f32 %v564, %v572
    %v577 = vadd.f32 %v565, %v573
    %v578 = vadd.f32 %v566, %v572
    %v579 = vadd.f32 %v567, %v573
    %v580 = vadd.f32 %v568, %v572
    %v581 = vadd.f32 %v569, %v573
    %vm582 = vcmask 130048
    %v583 = vsel %vm582, %v574, -inf
    %584 = vmax.xlane.f32.xlu0 %v583
    %v585 = vpop.xlane.xlu0 %584
    %v586 = vsel %vm582, %v575, -inf
    %587 = vmax.xlane.f32.xlu0 %v586
    %v588 = vpop.xlane.xlu0 %587
    %v589 = vsel %vm582, %v576, -inf
    %590 = vmax.xlane.f32.xlu0 %v589
    %v591 = vpop.xlane.xlu0 %590
    %v592 = vsel %vm582, %v577, -inf
    %593 = vmax.xlane.f32.xlu0 %v592
    %v594 = vpop.xlane.xlu0 %593
    %v595 = vsel %vm582, %v578, -inf
    %596 = vmax.xlane.f32.xlu0 %v595
    %v597 = vpop.xlane.xlu0 %596
    %v598 = vsel %vm582, %v579, -inf
    %599 = vmax.xlane.f32.xlu0 %v598
    %v600 = vpop.xlane.xlu0 %599
    %v601 = vsel %vm582, %v580, -inf
    %602 = vmax.xlane.f32.xlu0 %v601
    %v603 = vpop.xlane.xlu0 %602
    %v604 = vsel %vm582, %v581, -inf
    %605 = vmax.xlane.f32.xlu0 %v604
    %v606 = vpop.xlane.xlu0 %605
    %v607 = vsub.f32 %v574, %v585
    %v608 = vsub.f32 %v575, %v588
    %v609 = vsub.f32 %v576, %v591
    %v610 = vsub.f32 %v577, %v594
    %v611 = vsub.f32 %v578, %v597
    %v612 = vsub.f32 %v579, %v600
    %v613 = vsub.f32 %v580, %v603
    %v614 = vsub.f32 %v581, %v606
    %v615 = vmul.f32 %v607, 1.442695
    %v616 = vpow.pop %v615
    %v617 = vmul.f32 %v608, 1.442695
    %v618 = vpow.pop %v617
    %v619 = vmul.f32 %v609, 1.442695
    %v620 = vpow.pop %v619
    %v621 = vmul.f32 %v610, 1.442695
    %v622 = vpow.pop %v621
    %v623 = vmul.f32 %v611, 1.442695
    %v624 = vpow.pop %v623
    %v625 = vmul.f32 %v612, 1.442695
    %v626 = vpow.pop %v625
    %v627 = vmul.f32 %v613, 1.442695
    %v628 = vpow.pop %v627
    %v629 = vmul.f32 %v614, 1.442695
    %v630 = vpow.pop %v629
    %v631 = vsel %vm582, %v616, 0.0
    %632 = vadd.xlane.f32.xlu0 %v631
    %v633 = vpop.xlane.xlu0 %632
    %v634 = vsel %vm582, %v618, 0.0
    %635 = vadd.xlane.f32.xlu0 %v634
    %v636 = vpop.xlane.xlu0 %635
    %v637 = vsel %vm582, %v620, 0.0
    %638 = vadd.xlane.f32.xlu0 %v637
    %v639 = vpop.xlane.xlu0 %638
    %v640 = vsel %vm582, %v622, 0.0
    %641 = vadd.xlane.f32.xlu0 %v640
    %v642 = vpop.xlane.xlu0 %641
    %v643 = vsel %vm582, %v624, 0.0
    %644 = vadd.xlane.f32.xlu0 %v643
    %v645 = vpop.xlane.xlu0 %644
    %v646 = vsel %vm582, %v626, 0.0
    %647 = vadd.xlane.f32.xlu0 %v646
    %v648 = vpop.xlane.xlu0 %647
    %v649 = vsel %vm582, %v628, 0.0
    %650 = vadd.xlane.f32.xlu0 %v649
    %v651 = vpop.xlane.xlu0 %650
    %v652 = vsel %vm582, %v630, 0.0
    %653 = vadd.xlane.f32.xlu0 %v652
    %v654 = vpop.xlane.xlu0 %653
    %v655 = vrcp.pop %v633
    %v656 = vrcp.pop %v636
    %v657 = vrcp.pop %v639
    %v658 = vrcp.pop %v642
    %v659 = vrcp.pop %v645
    %v660 = vrcp.pop %v648
    %v661 = vrcp.pop %v651
    %v662 = vrcp.pop %v654
    %v663 = vmul.f32 %v616, %v655
    %v664 = vmul.f32 %v618, %v656
    %v665 = vmul.f32 %v620, %v657
    %v666 = vmul.f32 %v622, %v658
    %v667 = vmul.f32 %v624, %v659
    %v668 = vmul.f32 %v626, %v660
    %v669 = vmul.f32 %v628, %v661
    %v670 = vmul.f32 %v630, %v662
    %671 = vrot.lane.b32.xlu0 %v183, 64
    %v672 = vpop.permute.xlu0 %671
    %673 = vrot.lane.b32.xlu0 %v188, 64
    %v674 = vpop.permute.xlu0 %673
    %v678 = vsel %vm582, %v663, 0
    %v681 = vsel %vm582, %v664, 0
    %683 = vmatprep.subr.mxu0 0.0
    %684 = vmatpush1.msra.mxu0 %v672
    %685 = vmatprep.subr.mxu0 0.0
    %686 = vmatpush1.msra.mxu0 %v674
    %687 = vmatprep.subr.mxu0 0.0
    %688 = vmatpush1.msra.mxu0 0.0
    %689 = vmatprep.subr.mxu0 0.0
    %690 = vmatpush1.msra.mxu0 0.0
    %691 = vmatprep.subr.mxu0 0.0
    %692 = vmatpush1.msra.mxu0 0.0
    %693 = vmatprep.subr.mxu0 0.0
    %694 = vmatpush1.msra.mxu0 0.0
    %695 = vmatprep.subr.mxu0 0.0
    %696 = vmatpush1.msra.mxu0 0.0
    %697 = vmatprep.subr.mxu0 0.0
    %698 = vmatpush1.msra.mxu0 0.0
    %699 = vmatprep.subr.mxu0 0.0
    %700 = vmatpush1.msra.mxu0 0.0
    %701 = vmatprep.subr.mxu0 0.0
    %702 = vmatpush1.msra.mxu0 0.0
    %703 = vmatprep.subr.mxu0 0.0
    %704 = vmatpush1.msra.mxu0 0.0
    %705 = vmatprep.subr.mxu0 0.0
    %706 = vmatpush1.msra.mxu0 0.0
    %707 = vmatprep.subr.mxu0 0.0
    %708 = vmatpush1.msra.mxu0 0.0
    %709 = vmatprep.subr.mxu0 0.0
    %710 = vmatpush1.msra.mxu0 0.0
    %711 = vmatprep.subr.mxu0 0.0
    %712 = vmatpush1.msra.mxu0 0.0
    %713 = vmatprep.subr.mxu0 0.0
    %714 = vmatpush1.msra.mxu0 0.0
    %715 = vmatprep.subr.mxu0 0.0
    %716 = vmatpush1.msra.mxu0 0.0
    %717 = vmatprep.subr.mxu0 0.0
    %718 = vmatpush1.msra.mxu0 0.0
    %719 = vmatprep.subr.mxu0 0.0
    %720 = vmatpush1.msra.mxu0 0.0
    %721 = vmatprep.subr.mxu0 0.0
    %722 = vmatpush1.msra.mxu0 0.0
    %723 = vmatprep.subr.mxu0 0.0
    %724 = vmatpush1.msra.mxu0 0.0
    %725 = vmatprep.subr.mxu0 0.0
    %726 = vmatpush1.msra.mxu0 0.0
    %727 = vmatprep.subr.mxu0 0.0
    %728 = vmatpush1.msra.mxu0 0.0
    %729 = vmatprep.subr.mxu0 0.0
    %730 = vmatpush1.msra.mxu0 0.0
    %731 = vmatprep.subr.mxu0 0.0
    %732 = vmatpush1.msra.mxu0 0.0
    %733 = vmatprep.subr.mxu0 0.0
    %734 = vmatpush1.msra.mxu0 0.0
    %735 = vmatprep.subr.mxu0 0.0
    %736 = vmatpush1.msra.mxu0 0.0
    %737 = vmatprep.subr.mxu0 0.0
    %738 = vmatpush1.msra.mxu0 0.0
    %739 = vmatprep.subr.mxu0 0.0
    %740 = vmatpush1.msra.mxu0 0.0
    %741 = vmatprep.subr.mxu0 0.0
    %742 = vmatpush1.msra.mxu0 0.0
    %743 = vmatprep.subr.mxu0 0.0
    %744 = vmatpush1.msra.mxu0 0.0
    %745 = vmatprep.subr.mxu0 0.0
    %746 = vmatpush1.msra.mxu0 0.0
    %747 = vmatprep.mubr.f32.mxu0 0.0
    %748 = vmatmul.mubr.f32.gmra.mrb[0].mxu0 %v678
    %v749 = vpop.f32.mrb[0].mxu0
    %v750 = vadd.f32 0.0, %v749
    %v751 = vpop.f32.mrb[0].mxu0
    %752 = vmatprep.mubr.f32.mxu0 0.0
    %753 = vmatmul.mubr.f32.gmra.mrb[0].mxu0 %v681
    %v754 = vpop.f32.mrb[0].mxu0
    %v755 = vadd.f32 0.0, %v754
    %v756 = vpop.f32.mrb[0].mxu0
    %757 = vdwg.mxu0
    %758 = vrot.lane.b32.xlu0 %v194, 64
    %v759 = vpop.permute.xlu0 %758
    %760 = vrot.lane.b32.xlu0 %v196, 64
    %v761 = vpop.permute.xlu0 %760
    %v765 = vsel %vm582, %v665, 0
    %v768 = vsel %vm582, %v666, 0
    %770 = vmatprep.subr.mxu0 0.0
    %771 = vmatpush1.msra.mxu0 %v759
    %772 = vmatprep.subr.mxu0 0.0
    %773 = vmatpush1.msra.mxu0 %v761
    %774 = vmatprep.subr.mxu0 0.0
    %775 = vmatpush1.msra.mxu0 0.0
    %776 = vmatprep.subr.mxu0 0.0
    %777 = vmatpush1.msra.mxu0 0.0
    %778 = vmatprep.subr.mxu0 0.0
    %779 = vmatpush1.msra.mxu0 0.0
    %780 = vmatprep.subr.mxu0 0.0
    %781 = vmatpush1.msra.mxu0 0.0
    %782 = vmatprep.subr.mxu0 0.0
    %783 = vmatpush1.msra.mxu0 0.0
    %784 = vmatprep.subr.mxu0 0.0
    %785 = vmatpush1.msra.mxu0 0.0
    %786 = vmatprep.subr.mxu0 0.0
    %787 = vmatpush1.msra.mxu0 0.0
    %788 = vmatprep.subr.mxu0 0.0
    %789 = vmatpush1.msra.mxu0 0.0
    %790 = vmatprep.subr.mxu0 0.0
    %791 = vmatpush1.msra.mxu0 0.0
    %792 = vmatprep.subr.mxu0 0.0
    %793 = vmatpush1.msra.mxu0 0.0
    %794 = vmatprep.subr.mxu0 0.0
    %795 = vmatpush1.msra.mxu0 0.0
    %796 = vmatprep.subr.mxu0 0.0
    %797 = vmatpush1.msra.mxu0 0.0
    %798 = vmatprep.subr.mxu0 0.0
    %799 = vmatpush1.msra.mxu0 0.0
    %800 = vmatprep.subr.mxu0 0.0
    %801 = vmatpush1.msra.mxu0 0.0
    %802 = vmatprep.subr.mxu0 0.0
    %803 = vmatpush1.msra.mxu0 0.0
    %804 = vmatprep.subr.mxu0 0.0
    %805 = vmatpush1.msra.mxu0 0.0
    %806 = vmatprep.subr.mxu0 0.0
    %807 = vmatpush1.msra.mxu0 0.0
    %808 = vmatprep.subr.mxu0 0.0
    %809 = vmatpush1.msra.mxu0 0.0
    %810 = vmatprep.subr.mxu0 0.0
    %811 = vmatpush1.msra.mxu0 0.0
    %812 = vmatprep.subr.mxu0 0.0
    %813 = vmatpush1.msra.mxu0 0.0
    %814 = vmatprep.subr.mxu0 0.0
    %815 = vmatpush1.msra.mxu0 0.0
    %816 = vmatprep.subr.mxu0 0.0
    %817 = vmatpush1.msra.mxu0 0.0
    %818 = vmatprep.subr.mxu0 0.0
    %819 = vmatpush1.msra.mxu0 0.0
    %820 = vmatprep.subr.mxu0 0.0
    %821 = vmatpush1.msra.mxu0 0.0
    %822 = vmatprep.subr.mxu0 0.0
    %823 = vmatpush1.msra.mxu0 0.0
    %824 = vmatprep.subr.mxu0 0.0
    %825 = vmatpush1.msra.mxu0 0.0
    %826 = vmatprep.subr.mxu0 0.0
    %827 = vmatpush1.msra.mxu0 0.0
    %828 = vmatprep.subr.mxu0 0.0
    %829 = vmatpush1.msra.mxu0 0.0
    %830 = vmatprep.subr.mxu0 0.0
    %831 = vmatpush1.msra.mxu0 0.0
    %832 = vmatprep.subr.mxu0 0.0
    %833 = vmatpush1.msra.mxu0 0.0
    %834 = vmatprep.mubr.f32.mxu0 0.0
    %835 = vmatmul.mubr.f32.gmra.mrb[0].mxu0 %v765
    %v836 = vpop.f32.mrb[0].mxu0
    %v837 = vadd.f32 0.0, %v836
    %v838 = vpop.f32.mrb[0].mxu0
    %839 = vmatprep.mubr.f32.mxu0 0.0
    %840 = vmatmul.mubr.f32.gmra.mrb[0].mxu0 %v768
    %v841 = vpop.f32.mrb[0].mxu0
    %v842 = vadd.f32 0.0, %v841
    %v843 = vpop.f32.mrb[0].mxu0
    %844 = vdwg.mxu0
    %845 = vrot.lane.b32.xlu0 %v198, 64
    %v846 = vpop.permute.xlu0 %845
    %847 = vrot.lane.b32.xlu0 %v200, 64
    %v848 = vpop.permute.xlu0 %847
    %v852 = vsel %vm582, %v667, 0
    %v855 = vsel %vm582, %v668, 0
    %857 = vmatprep.subr.mxu0 0.0
    %858 = vmatpush1.msra.mxu0 %v846
    %859 = vmatprep.subr.mxu0 0.0
    %860 = vmatpush1.msra.mxu0 %v848
    %861 = vmatprep.subr.mxu0 0.0
    %862 = vmatpush1.msra.mxu0 0.0
    %863 = vmatprep.subr.mxu0 0.0
    %864 = vmatpush1.msra.mxu0 0.0
    %865 = vmatprep.subr.mxu0 0.0
    %866 = vmatpush1.msra.mxu0 0.0
    %867 = vmatprep.subr.mxu0 0.0
    %868 = vmatpush1.msra.mxu0 0.0
    %869 = vmatprep.subr.mxu0 0.0
    %870 = vmatpush1.msra.mxu0 0.0
    %871 = vmatprep.subr.mxu0 0.0
    %872 = vmatpush1.msra.mxu0 0.0
    %873 = vmatprep.subr.mxu0 0.0
    %874 = vmatpush1.msra.mxu0 0.0
    %875 = vmatprep.subr.mxu0 0.0
    %876 = vmatpush1.msra.mxu0 0.0
    %877 = vmatprep.subr.mxu0 0.0
    %878 = vmatpush1.msra.mxu0 0.0
    %879 = vmatprep.subr.mxu0 0.0
    %880 = vmatpush1.msra.mxu0 0.0
    %881 = vmatprep.subr.mxu0 0.0
    %882 = vmatpush1.msra.mxu0 0.0
    %883 = vmatprep.subr.mxu0 0.0
    %884 = vmatpush1.msra.mxu0 0.0
    %885 = vmatprep.subr.mxu0 0.0
    %886 = vmatpush1.msra.mxu0 0.0
    %887 = vmatprep.subr.mxu0 0.0
    %888 = vmatpush1.msra.mxu0 0.0
    %889 = vmatprep.subr.mxu0 0.0
    %890 = vmatpush1.msra.mxu0 0.0
    %891 = vmatprep.subr.mxu0 0.0
    %892 = vmatpush1.msra.mxu0 0.0
    %893 = vmatprep.subr.mxu0 0.0
    %894 = vmatpush1.msra.mxu0 0.0
    %895 = vmatprep.subr.mxu0 0.0
    %896 = vmatpush1.msra.mxu0 0.0
    %897 = vmatprep.subr.mxu0 0.0
    %898 = vmatpush1.msra.mxu0 0.0
    %899 = vmatprep.subr.mxu0 0.0
    %900 = vmatpush1.msra.mxu0 0.0
    %901 = vmatprep.subr.mxu0 0.0
    %902 = vmatpush1.msra.mxu0 0.0
    %903 = vmatprep.subr.mxu0 0.0
    %904 = vmatpush1.msra.mxu0 0.0
    %905 = vmatprep.subr.mxu0 0.0
    %906 = vmatpush1.msra.mxu0 0.0
    %907 = vmatprep.subr.mxu0 0.0
    %908 = vmatpush1.msra.mxu0 0.0
    %909 = vmatprep.subr.mxu0 0.0
    %910 = vmatpush1.msra.mxu0 0.0
    %911 = vmatprep.subr.mxu0 0.0
    %912 = vmatpush1.msra.mxu0 0.0
    %913 = vmatprep.subr.mxu0 0.0
    %914 = vmatpush1.msra.mxu0 0.0
    %915 = vmatprep.subr.mxu0 0.0
    %916 = vmatpush1.msra.mxu0 0.0
    %917 = vmatprep.subr.mxu0 0.0
    %918 = vmatpush1.msra.mxu0 0.0
    %919 = vmatprep.subr.mxu0 0.0
    %920 = vmatpush1.msra.mxu0 0.0
    %921 = vmatprep.mubr.f32.mxu0 0.0
    %922 = vmatmul.mubr.f32.gmra.mrb[0].mxu0 %v852
    %v923 = vpop.f32.mrb[0].mxu0
    %v924 = vadd.f32 0.0, %v923
    %v925 = vpop.f32.mrb[0].mxu0
    %926 = vmatprep.mubr.f32.mxu0 0.0
    %927 = vmatmul.mubr.f32.gmra.mrb[0].mxu0 %v855
    %v928 = vpop.f32.mrb[0].mxu0
    %v929 = vadd.f32 0.0, %v928
    %v930 = vpop.f32.mrb[0].mxu0
    %931 = vdwg.mxu0
    %932 = vrot.lane.b32.xlu0 %v202, 64
    %v933 = vpop.permute.xlu0 %932
    %934 = vrot.lane.b32.xlu0 %v204, 64
    %v935 = vpop.permute.xlu0 %934
    %v939 = vsel %vm582, %v669, 0
    %v942 = vsel %vm582, %v670, 0
    %944 = vmatprep.subr.mxu0 0.0
    %945 = vmatpush1.msra.mxu0 %v933
    %946 = vmatprep.subr.mxu0 0.0
    %947 = vmatpush1.msra.mxu0 %v935
    %948 = vmatprep.subr.mxu0 0.0
    %949 = vmatpush1.msra.mxu0 0.0
    %950 = vmatprep.subr.mxu0 0.0
    %951 = vmatpush1.msra.mxu0 0.0
    %952 = vmatprep.subr.mxu0 0.0
    %953 = vmatpush1.msra.mxu0 0.0
    %954 = vmatprep.subr.mxu0 0.0
    %955 = vmatpush1.msra.mxu0 0.0
    %956 = vmatprep.subr.mxu0 0.0
    %957 = vmatpush1.msra.mxu0 0.0
    %958 = vmatprep.subr.mxu0 0.0
    %959 = vmatpush1.msra.mxu0 0.0
    %960 = vmatprep.subr.mxu0 0.0
    %961 = vmatpush1.msra.mxu0 0.0
    %962 = vmatprep.subr.mxu0 0.0
    %963 = vmatpush1.msra.mxu0 0.0
    %964 = vmatprep.subr.mxu0 0.0
    %965 = vmatpush1.msra.mxu0 0.0
    %966 = vmatprep.subr.mxu0 0.0
    %967 = vmatpush1.msra.mxu0 0.0
    %968 = vmatprep.subr.mxu0 0.0
    %969 = vmatpush1.msra.mxu0 0.0
    %970 = vmatprep.subr.mxu0 0.0
    %971 = vmatpush1.msra.mxu0 0.0
    %972 = vmatprep.subr.mxu0 0.0
    %973 = vmatpush1.msra.mxu0 0.0
    %974 = vmatprep.subr.mxu0 0.0
    %975 = vmatpush1.msra.mxu0 0.0
    %976 = vmatprep.subr.mxu0 0.0
    %977 = vmatpush1.msra.mxu0 0.0
    %978 = vmatprep.subr.mxu0 0.0
    %979 = vmatpush1.msra.mxu0 0.0
    %980 = vmatprep.subr.mxu0 0.0
    %981 = vmatpush1.msra.mxu0 0.0
    %982 = vmatprep.subr.mxu0 0.0
    %983 = vmatpush1.msra.mxu0 0.0
    %984 = vmatprep.subr.mxu0 0.0
    %985 = vmatpush1.msra.mxu0 0.0
    %986 = vmatprep.subr.mxu0 0.0
    %987 = vmatpush1.msra.mxu0 0.0
    %988 = vmatprep.subr.mxu0 0.0
    %989 = vmatpush1.msra.mxu0 0.0
    %990 = vmatprep.subr.mxu0 0.0
    %991 = vmatpush1.msra.mxu0 0.0
    %992 = vmatprep.subr.mxu0 0.0
    %993 = vmatpush1.msra.mxu0 0.0
    %994 = vmatprep.subr.mxu0 0.0
    %995 = vmatpush1.msra.mxu0 0.0
    %996 = vmatprep.subr.mxu0 0.0
    %997 = vmatpush1.msra.mxu0 0.0
    %998 = vmatprep.subr.mxu0 0.0
    %999 = vmatpush1.msra.mxu0 0.0
    %1000 = vmatprep.subr.mxu0 0.0
    %1001 = vmatpush1.msra.mxu0 0.0
    %1002 = vmatprep.subr.mxu0 0.0
    %1003 = vmatpush1.msra.mxu0 0.0
    %1004 = vmatprep.subr.mxu0 0.0
    %1005 = vmatpush1.msra.mxu0 0.0
    %1006 = vmatprep.subr.mxu0 0.0
    %1007 = vmatpush1.msra.mxu0 0.0
    %1008 = vmatprep.mubr.f32.mxu0 0.0
    %1009 = vmatmul.mubr.f32.gmra.mrb[0].mxu0 %v939
    %v1010 = vpop.f32.mrb[0].mxu0
    %v1011 = vadd.f32 0.0, %v1010
    %v1012 = vpop.f32.mrb[0].mxu0
    %1013 = vmatprep.mubr.f32.mxu0 0.0
    %1014 = vmatmul.mubr.f32.gmra.mrb[0].mxu0 %v942
    %v1015 = vpop.f32.mrb[0].mxu0
    %v1016 = vadd.f32 0.0, %v1015
    %v1017 = vpop.f32.mrb[0].mxu0
    %1018 = vdwg.mxu0
    %1021 = vrot.lane.b32.xlu0 %v837, 8
    %v1022 = vpop.permute.xlu0 %1021
    %1023 = vrot.lane.b32.xlu0 %v842, 8
    %v1024 = vpop.permute.xlu0 %1023
    %1029 = vrot.lane.b32.xlu0 %v924, 16
    %v1030 = vpop.permute.xlu0 %1029
    %1031 = vrot.lane.b32.xlu0 %v929, 16
    %v1032 = vpop.permute.xlu0 %1031
    %1037 = vrot.lane.b32.xlu0 %v1011, 24
    %v1038 = vpop.permute.xlu0 %1037
    %1039 = vrot.lane.b32.xlu0 %v1016, 24
    %v1040 = vpop.permute.xlu0 %1039
    %v1043 = vsel %vm209, %v750, %v1022
    %v1044 = vsel %vm209, %v755, %v1024
    %v1045 = vsel %vm582, %v1043, %v1030
    %v1046 = vsel %vm582, %v1044, %v1032
    %vm1047 = vcmask 195584
    %v1048 = vsel %vm1047, %v1045, %v1038
    %v1049 = vsel %vm1047, %v1046, %v1040
    %v1050 = vld [vmem:[%s6] sm:$0xf]
    %v1051 = vld [vmem:[%s6 + $0x4] sm:$0xf]
    %v1052 = vld [vmem:[%s6 + $0x8] sm:$0xf]
    %v1053 = vld [vmem:[%s6 + $0xc] sm:$0xf]
    %v1054 = vunpack.c.l.bf16 %v1050
    %v1055 = vunpack.c.l.bf16 %v1051
    %v1056 = vunpack.c.l.bf16 %v1052
    %v1057 = vunpack.c.l.bf16 %v1053
    %v1058 = vld [vmem:[%s7] sm:$0x1]
    %v1059 = vunpack.c.l.bf16 %v1058
    %v1060 = vlaneseq
    %v1061 = vshrl.u32 %v1060, 7
    %v1062 = vsub.s32 0, %v1061
    %v1063 = vrot.slane %v1059, %v1062
    %v1065 = vsel %vm56, %v1048, 0
    %v1068 = vsel %vm56, %v1049, 0
    %1070 = vmatprep.subr.mxu0 0.0
    %1071 = vmatpush1.msra.mxu0 %v1054
    %1072 = vmatprep.subr.mxu0 0.0
    %1073 = vmatpush1.msra.mxu0 %v1055
    %1074 = vmatprep.subr.mxu0 0.0
    %1075 = vmatpush1.msra.mxu0 %v1056
    %1076 = vmatprep.subr.mxu0 0.0
    %1077 = vmatpush1.msra.mxu0 %v1057
    %1078 = vmatprep.subr.mxu0 0.0
    %1079 = vmatpush1.msra.mxu0 0.0
    %1080 = vmatprep.subr.mxu0 0.0
    %1081 = vmatpush1.msra.mxu0 0.0
    %1082 = vmatprep.subr.mxu0 0.0
    %1083 = vmatpush1.msra.mxu0 0.0
    %1084 = vmatprep.subr.mxu0 0.0
    %1085 = vmatpush1.msra.mxu0 0.0
    %1086 = vmatprep.subr.mxu0 0.0
    %1087 = vmatpush1.msra.mxu0 0.0
    %1088 = vmatprep.subr.mxu0 0.0
    %1089 = vmatpush1.msra.mxu0 0.0
    %1090 = vmatprep.subr.mxu0 0.0
    %1091 = vmatpush1.msra.mxu0 0.0
    %1092 = vmatprep.subr.mxu0 0.0
    %1093 = vmatpush1.msra.mxu0 0.0
    %1094 = vmatprep.subr.mxu0 0.0
    %1095 = vmatpush1.msra.mxu0 0.0
    %1096 = vmatprep.subr.mxu0 0.0
    %1097 = vmatpush1.msra.mxu0 0.0
    %1098 = vmatprep.subr.mxu0 0.0
    %1099 = vmatpush1.msra.mxu0 0.0
    %1100 = vmatprep.subr.mxu0 0.0
    %1101 = vmatpush1.msra.mxu0 0.0
    %1102 = vmatprep.subr.mxu0 0.0
    %1103 = vmatpush1.msra.mxu0 0.0
    %1104 = vmatprep.subr.mxu0 0.0
    %1105 = vmatpush1.msra.mxu0 0.0
    %1106 = vmatprep.subr.mxu0 0.0
    %1107 = vmatpush1.msra.mxu0 0.0
    %1108 = vmatprep.subr.mxu0 0.0
    %1109 = vmatpush1.msra.mxu0 0.0
    %1110 = vmatprep.subr.mxu0 0.0
    %1111 = vmatpush1.msra.mxu0 0.0
    %1112 = vmatprep.subr.mxu0 0.0
    %1113 = vmatpush1.msra.mxu0 0.0
    %1114 = vmatprep.subr.mxu0 0.0
    %1115 = vmatpush1.msra.mxu0 0.0
    %1116 = vmatprep.subr.mxu0 0.0
    %1117 = vmatpush1.msra.mxu0 0.0
    %1118 = vmatprep.subr.mxu0 0.0
    %1119 = vmatpush1.msra.mxu0 0.0
    %1120 = vmatprep.subr.mxu0 0.0
    %1121 = vmatpush1.msra.mxu0 0.0
    %1122 = vmatprep.subr.mxu0 0.0
    %1123 = vmatpush1.msra.mxu0 0.0
    %1124 = vmatprep.subr.mxu0 0.0
    %1125 = vmatpush1.msra.mxu0 0.0
    %1126 = vmatprep.subr.mxu0 0.0
    %1127 = vmatpush1.msra.mxu0 0.0
    %1128 = vmatprep.subr.mxu0 0.0
    %1129 = vmatpush1.msra.mxu0 0.0
    %1130 = vmatprep.subr.mxu0 0.0
    %1131 = vmatpush1.msra.mxu0 0.0
    %1132 = vmatprep.subr.mxu0 0.0
    %1133 = vmatpush1.msra.mxu0 0.0
    %1134 = vmatprep.mubr.f32.mxu0 0.0
    %1135 = vmatmul.mubr.f32.gmra.mrb[0].mxu0 %v1065
    %v1136 = vpop.f32.mrb[0].mxu0
    %v1137 = vadd.f32 %v1063, %v1136
    %v1138 = vpop.f32.mrb[0].mxu0
    %1139 = vmatprep.mubr.f32.mxu0 0.0
    %1140 = vmatmul.mubr.f32.gmra.mrb[0].mxu0 %v1068
    %v1141 = vpop.f32.mrb[0].mxu0
    %v1142 = vadd.f32 %v1063, %v1141
    %v1143 = vpop.f32.mrb[0].mxu0
    %1144 = vdwg.mxu0
    %v1145 = vadd.f32 %v48, %v1137
    %v1146 = vadd.f32 %v49, %v1142
    %v1147 = vld [vmem:[%s8] sm:$0x1]
    %v1148 = vunpack.c.l.bf16 %v1147
    %v1149 = vld [vmem:[%s9] sm:$0x1]
    %v1150 = vunpack.c.l.bf16 %v1149
    %v1151 = vsel %vm56, %v1145, 0.0
    %1152 = vadd.xlane.f32.xlu0 %v1151
    %v1153 = vpop.xlane.xlu0 %1152
    %v1154 = vsel %vm56, %v1146, 0.0
    %1155 = vadd.xlane.f32.xlu0 %v1154
    %v1156 = vpop.xlane.xlu0 %1155
    %v1157 = vmul.f32 %v1153, %v63
    %v1158 = vmul.f32 %v1156, %v63
    %v1159 = vsub.f32 %v1145, %v1157
    %v1160 = vsub.f32 %v1146, %v1158
    %v1161 = vmul.f32 %v1159, %v1159
    %v1162 = vmul.f32 %v1160, %v1160
    %v1163 = vsel %vm56, %v1161, 0.0
    %1164 = vadd.xlane.f32.xlu0 %v1163
    %v1165 = vpop.xlane.xlu0 %1164
    %v1166 = vsel %vm56, %v1162, 0.0
    %1167 = vadd.xlane.f32.xlu0 %v1166
    %v1168 = vpop.xlane.xlu0 %1167
    %v1169 = vmul.f32 %v1165, %v63
    %v1170 = vmul.f32 %v1168, %v63
    %v1171 = vadd.f32 %v1169, 1e-05
    %v1172 = vadd.f32 %v1170, 1e-05
    %v1173 = vrsqrt.pop %v1171
    %v1174 = vrsqrt.pop %v1172
    %v1175 = vmul.f32 %v1159, %v1173
    %v1176 = vmul.f32 %v1160, %v1174
    %v1177 = vlaneseq
    %v1178 = vshrl.u32 %v1177, 7
    %v1179 = vsub.s32 0, %v1178
    %v1180 = vrot.slane %v1148, %v1179
    %v1181 = vmul.f32 %v1175, %v1180
    %v1182 = vmul.f32 %v1176, %v1180
    %v1183 = vlaneseq
    %v1184 = vshrl.u32 %v1183, 7
    %v1185 = vsub.s32 0, %v1184
    %v1186 = vrot.slane %v1150, %v1185
    %v1187 = vadd.f32 %v1181, %v1186
    %v1188 = vadd.f32 %v1182, %v1186
    %v1189 = vld [vmem:[%s10] sm:$0xf]
    %v1190 = vld [vmem:[%s10 + $0x4] sm:$0xf]
    %v1191 = vld [vmem:[%s10 + $0x8] sm:$0xf]
    %v1192 = vld [vmem:[%s10 + $0xc] sm:$0xf]
    %v1193 = vunpack.c.l.bf16 %v1189
    %v1194 = vunpack.c.l.bf16 %v1190
    %v1195 = vunpack.c.l.bf16 %v1191
    %v1196 = vunpack.c.l.bf16 %v1192
    %v1197 = vld [vmem:[%s11] sm:$0x1]
    %v1198 = vunpack.c.l.bf16 %v1197
    %v1199 = vlaneseq
    %v1200 = vshrl.u32 %v1199, 7
    %v1201 = vsub.s32 0, %v1200
    %v1202 = vrot.slane %v1198, %v1201
    %v1204 = vsel %vm56, %v1187, 0
    %v1207 = vsel %vm56, %v1188, 0
    %1209 = vmatprep.subr.mxu0 0.0
    %1210 = vmatpush1.msra.mxu0 %v1193
    %1211 = vmatprep.subr.mxu0 0.0
    %1212 = vmatpush1.msra.mxu0 %v1194
    %1213 = vmatprep.subr.mxu0 0.0
    %1214 = vmatpush1.msra.mxu0 %v1195
    %1215 = vmatprep.subr.mxu0 0.0
    %1216 = vmatpush1.msra.mxu0 %v1196
    %1217 = vmatprep.subr.mxu0 0.0
    %1218 = vmatpush1.msra.mxu0 0.0
    %1219 = vmatprep.subr.mxu0 0.0
    %1220 = vmatpush1.msra.mxu0 0.0
    %1221 = vmatprep.subr.mxu0 0.0
    %1222 = vmatpush1.msra.mxu0 0.0
    %1223 = vmatprep.subr.mxu0 0.0
    %1224 = vmatpush1.msra.mxu0 0.0
    %1225 = vmatprep.subr.mxu0 0.0
    %1226 = vmatpush1.msra.mxu0 0.0
    %1227 = vmatprep.subr.mxu0 0.0
    %1228 = vmatpush1.msra.mxu0 0.0
    %1229 = vmatprep.subr.mxu0 0.0
    %1230 = vmatpush1.msra.mxu0 0.0
    %1231 = vmatprep.subr.mxu0 0.0
    %1232 = vmatpush1.msra.mxu0 0.0
    %1233 = vmatprep.subr.mxu0 0.0
    %1234 = vmatpush1.msra.mxu0 0.0
    %1235 = vmatprep.subr.mxu0 0.0
    %1236 = vmatpush1.msra.mxu0 0.0
    %1237 = vmatprep.subr.mxu0 0.0
    %1238 = vmatpush1.msra.mxu0 0.0
    %1239 = vmatprep.subr.mxu0 0.0
    %1240 = vmatpush1.msra.mxu0 0.0
    %1241 = vmatprep.subr.mxu0 0.0
    %1242 = vmatpush1.msra.mxu0 0.0
    %1243 = vmatprep.subr.mxu0 0.0
    %1244 = vmatpush1.msra.mxu0 0.0
    %1245 = vmatprep.subr.mxu0 0.0
    %1246 = vmatpush1.msra.mxu0 0.0
    %1247 = vmatprep.subr.mxu0 0.0
    %1248 = vmatpush1.msra.mxu0 0.0
    %1249 = vmatprep.subr.mxu0 0.0
    %1250 = vmatpush1.msra.mxu0 0.0
    %1251 = vmatprep.subr.mxu0 0.0
    %1252 = vmatpush1.msra.mxu0 0.0
    %1253 = vmatprep.subr.mxu0 0.0
    %1254 = vmatpush1.msra.mxu0 0.0
    %1255 = vmatprep.subr.mxu0 0.0
    %1256 = vmatpush1.msra.mxu0 0.0
    %1257 = vmatprep.subr.mxu0 0.0
    %1258 = vmatpush1.msra.mxu0 0.0
    %1259 = vmatprep.subr.mxu0 0.0
    %1260 = vmatpush1.msra.mxu0 0.0
    %1261 = vmatprep.subr.mxu0 0.0
    %1262 = vmatpush1.msra.mxu0 0.0
    %1263 = vmatprep.subr.mxu0 0.0
    %1264 = vmatpush1.msra.mxu0 0.0
    %1265 = vmatprep.subr.mxu0 0.0
    %1266 = vmatpush1.msra.mxu0 0.0
    %1267 = vmatprep.subr.mxu0 0.0
    %1268 = vmatpush1.msra.mxu0 0.0
    %1269 = vmatprep.subr.mxu0 0.0
    %1270 = vmatpush1.msra.mxu0 0.0
    %1271 = vmatprep.subr.mxu0 0.0
    %1272 = vmatpush1.msra.mxu0 0.0
    %1273 = vmatprep.mubr.f32.mxu0 0.0
    %1274 = vmatmul.mubr.f32.gmra.mrb[0].mxu0 %v1204
    %v1275 = vpop.f32.mrb[0].mxu0
    %v1276 = vadd.f32 %v1202, %v1275
    %v1277 = vpop.f32.mrb[0].mxu0
    %1278 = vmatprep.mubr.f32.mxu0 0.0
    %1279 = vmatmul.mubr.f32.gmra.mrb[0].mxu0 %v1207
    %v1280 = vpop.f32.mrb[0].mxu0
    %v1281 = vadd.f32 %v1202, %v1280
    %v1282 = vpop.f32.mrb[0].mxu0
    %1283 = vdwg.mxu0
    %v1284 = vmul.f32 %v1276, 0.5
    %v1285 = vmul.f32 %v1281, 0.5
    %v1286 = vmul.f32 %v1276, 0.70710677
    %v1287 = vmul.f32 %v1281, 0.70710677
    %v1288 = verf.f32.pop %v1286
    %v1289 = verf.f32.pop %v1287
    %v1290 = vadd.f32 %v1288, 1.0
    %v1291 = vadd.f32 %v1289, 1.0
    %v1292 = vmul.f32 %v1284, %v1290
    %v1293 = vmul.f32 %v1285, %v1291
    %v1294 = vld [vmem:[%s12] sm:$0xf]
    %v1295 = vld [vmem:[%s12 + $0x4] sm:$0xf]
    %v1296 = vld [vmem:[%s12 + $0x8] sm:$0xf]
    %v1297 = vld [vmem:[%s12 + $0xc] sm:$0xf]
    %v1298 = vld [vmem:[%s12 + $0x10] sm:$0xf]
    %v1299 = vld [vmem:[%s12 + $0x14] sm:$0xf]
    %v1300 = vld [vmem:[%s12 + $0x18] sm:$0xf]
    %v1301 = vld [vmem:[%s12 + $0x1c] sm:$0xf]
    %v1302 = vld [vmem:[%s12 + $0x20] sm:$0xf]
    %v1303 = vld [vmem:[%s12 + $0x24] sm:$0xf]
    %v1304 = vld [vmem:[%s12 + $0x28] sm:$0xf]
    %v1305 = vld [vmem:[%s12 + $0x2c] sm:$0xf]
    %v1306 = vld [vmem:[%s12 + $0x30] sm:$0xf]
    %v1307 = vld [vmem:[%s12 + $0x34] sm:$0xf]
    %v1308 = vld [vmem:[%s12 + $0x38] sm:$0xf]
    %v1309 = vld [vmem:[%s12 + $0x3c] sm:$0xf]
    %v1310 = vunpack.c.l.bf16 %v1294
    %v1311 = vunpack.c.l.bf16 %v1295
    %v1312 = vunpack.c.l.bf16 %v1296
    %v1313 = vunpack.c.l.bf16 %v1297
    %v1314 = vunpack.c.l.bf16 %v1298
    %v1315 = vunpack.c.l.bf16 %v1299
    %v1316 = vunpack.c.l.bf16 %v1300
    %v1317 = vunpack.c.l.bf16 %v1301
    %v1318 = vunpack.c.l.bf16 %v1302
    %v1319 = vunpack.c.l.bf16 %v1303
    %v1320 = vunpack.c.l.bf16 %v1304
    %v1321 = vunpack.c.l.bf16 %v1305
    %v1322 = vunpack.c.l.bf16 %v1306
    %v1323 = vunpack.c.l.bf16 %v1307
    %v1324 = vunpack.c.l.bf16 %v1308
    %v1325 = vunpack.c.l.bf16 %v1309
    %v1326 = vld [vmem:[%s13] sm:$0x1]
    %v1327 = vunpack.c.l.bf16 %v1326
    %v1328 = vlaneseq
    %v1329 = vshrl.u32 %v1328, 7
    %v1330 = vsub.s32 0, %v1329
    %v1331 = vrot.slane %v1327, %v1330
    %1332 = vmatprep.subr.mxu0 0.0
    %1333 = vmatpush1.msra.mxu0 %v1310
    %1334 = vmatprep.subr.mxu0 0.0
    %1335 = vmatpush1.msra.mxu0 %v1311
    %1336 = vmatprep.subr.mxu0 0.0
    %1337 = vmatpush1.msra.mxu0 %v1312
    %1338 = vmatprep.subr.mxu0 0.0
    %1339 = vmatpush1.msra.mxu0 %v1313
    %1340 = vmatprep.subr.mxu0 0.0
    %1341 = vmatpush1.msra.mxu0 %v1314
    %1342 = vmatprep.subr.mxu0 0.0
    %1343 = vmatpush1.msra.mxu0 %v1315
    %1344 = vmatprep.subr.mxu0 0.0
    %1345 = vmatpush1.msra.mxu0 %v1316
    %1346 = vmatprep.subr.mxu0 0.0
    %1347 = vmatpush1.msra.mxu0 %v1317
    %1348 = vmatprep.subr.mxu0 0.0
    %1349 = vmatpush1.msra.mxu0 %v1318
    %1350 = vmatprep.subr.mxu0 0.0
    %1351 = vmatpush1.msra.mxu0 %v1319
    %1352 = vmatprep.subr.mxu0 0.0
    %1353 = vmatpush1.msra.mxu0 %v1320
    %1354 = vmatprep.subr.mxu0 0.0
    %1355 = vmatpush1.msra.mxu0 %v1321
    %1356 = vmatprep.subr.mxu0 0.0
    %1357 = vmatpush1.msra.mxu0 %v1322
    %1358 = vmatprep.subr.mxu0 0.0
    %1359 = vmatpush1.msra.mxu0 %v1323
    %1360 = vmatprep.subr.mxu0 0.0
    %1361 = vmatpush1.msra.mxu0 %v1324
    %1362 = vmatprep.subr.mxu0 0.0
    %1363 = vmatpush1.msra.mxu0 %v1325
    %1364 = vmatprep.subr.mxu0 0.0
    %1365 = vmatpush1.msra.mxu0 0.0
    %1366 = vmatprep.subr.mxu0 0.0
    %1367 = vmatpush1.msra.mxu0 0.0
    %1368 = vmatprep.subr.mxu0 0.0
    %1369 = vmatpush1.msra.mxu0 0.0
    %1370 = vmatprep.subr.mxu0 0.0
    %1371 = vmatpush1.msra.mxu0 0.0
    %1372 = vmatprep.subr.mxu0 0.0
    %1373 = vmatpush1.msra.mxu0 0.0
    %1374 = vmatprep.subr.mxu0 0.0
    %1375 = vmatpush1.msra.mxu0 0.0
    %1376 = vmatprep.subr.mxu0 0.0
    %1377 = vmatpush1.msra.mxu0 0.0
    %1378 = vmatprep.subr.mxu0 0.0
    %1379 = vmatpush1.msra.mxu0 0.0
    %1380 = vmatprep.subr.mxu0 0.0
    %1381 = vmatpush1.msra.mxu0 0.0
    %1382 = vmatprep.subr.mxu0 0.0
    %1383 = vmatpush1.msra.mxu0 0.0
    %1384 = vmatprep.subr.mxu0 0.0
    %1385 = vmatpush1.msra.mxu0 0.0
    %1386 = vmatprep.subr.mxu0 0.0
    %1387 = vmatpush1.msra.mxu0 0.0
    %1388 = vmatprep.subr.mxu0 0.0
    %1389 = vmatpush1.msra.mxu0 0.0
    %1390 = vmatprep.subr.mxu0 0.0
    %1391 = vmatpush1.msra.mxu0 0.0
    %1392 = vmatprep.subr.mxu0 0.0
    %1393 = vmatpush1.msra.mxu0 0.0
    %1394 = vmatprep.subr.mxu0 0.0
    %1395 = vmatpush1.msra.mxu0 0.0
    %1396 = vmatprep.mubr.f32.mxu0 0.0
    %1397 = vmatmul.mubr.f32.gmra.mrb[0].mxu0 %v1292
    %v1398 = vpop.f32.mrb[0].mxu0
    %v1399 = vadd.f32 %v1331, %v1398
    %v1400 = vpop.f32.mrb[0].mxu0
    %1401 = vmatprep.mubr.f32.mxu0 0.0
    %1402 = vmatmul.mubr.f32.gmra.mrb[0].mxu0 %v1293
    %v1403 = vpop.f32.mrb[0].mxu0
    %v1404 = vadd.f32 %v1331, %v1403
    %v1405 = vpop.f32.mrb[0].mxu0
    %1406 = vdwg.mxu0
    %v1407 = vadd.f32 %v1145, %v1399
    %v1408 = vadd.f32 %v1146, %v1404
    %1409 = vst.msk [vmem:[#allocation2] sm:$0xff] %vm56, %v1407
    %1410 = vst.msk [vmem:[#allocation2 + $0x8] sm:$0xff] %vm56, %v1408
    // Predicated region
    $region58: #{tpu_custom_call.1} parent=1 // pred_check
      _
    $region59: #{tpu_custom_call.1} parent=1 // pred_check_branch
      %1412 = sbr.rel (0) target = $region61
    $region60: #{tpu_custom_call.1} parent=1 // pred_region
      %s1414 = ssub.s32 256, 256
      %1415 = vsyncadd [#allocation3], %s1414
      %s1416 = sshll.u32 [#allocation2], 4
      %s1417 = int_to_ptr.vmem [resolvable:$true] %s1416
      %1422 = dma.vmem_to_hbm [thread:$0]  %s1417, 256, %s14, [#allocation3], 128, 128, 8
    $region61: #{tpu_custom_call.1} parent=1 // pred_fallthru
      _
    // Predicated region
    $region62: #{tpu_custom_call.1} parent=1 // pred_check
      _
    $region63: #{tpu_custom_call.1} parent=1 // pred_check_branch
      %1424 = sbr.rel (0) target = $region65
    $region64: #{tpu_custom_call.1} parent=1 // pred_region
      %1425 = dma.done [#allocation3], 256
    $region65: #{tpu_custom_call.1} parent=1 // pred_fallthru
      _
    %1426 = vsyncpa [#allocation3], 1

</llo_original>
